<compile_context>
chip_gen: v7x
topology: tpu7x:2x2x1
jax: 0.10.0
libtpu: 0.0.40
codegen_flags: <defaults>
</compile_context>

<pallas_src>
import functools

import jax
import jax.numpy as jnp
from jax.experimental import pallas as pl
from jax.experimental.pallas import tpu as pltpu

LN_EPS = 1e-5


def _round_up(a, b):
    return (a + b - 1) // b * b


def _ln(h, w, b):
    mu = jnp.mean(h, axis=-1, keepdims=True)
    var = jnp.mean(jnp.square(h - mu), axis=-1, keepdims=True)
    return (h - mu) * jax.lax.rsqrt(var + LN_EPS) * w + b


def _decoder_kernel(x_ref,
                    w1e, vecE, w2eh, w2ex, b2e,
                    w1rx, w1re, vecR, w2rh, w2rxx, w2rxe, b2r,
                    w1tx, w1te, vecT, w2th, w2txx, w2txe, b2t,
                    pred_ref, epn_ref, *, compute_dtype):
    f32 = jnp.float32

    def dot(a, b):
        return jnp.dot(a.astype(compute_dtype), b.astype(compute_dtype),
                       preferred_element_type=f32)

    x = x_ref[...].astype(f32)                       # (TM, D)
    TM = x.shape[0]

    # ---- endpoint_predictor: residual MLP(D -> 12) ----
    b1e, lnwe, lnbe = vecE[0:1, :], vecE[1:2, :], vecE[2:3, :]
    h = jnp.maximum(_ln(dot(x, w1e[...]) + b1e, lnwe, lnbe), 0.0)
    ep = dot(h, w2eh[...]) + dot(x, w2ex[...]) + b2e[...]          # (TM, 12)

    # ---- x-dependent partial products shared by all 6 modes (computed once) ----
    b1r, lnwr, lnbr = vecR[0:1, :], vecR[1:2, :], vecR[2:3, :]
    b1t, lnwt, lnbt = vecT[0:1, :], vecT[1:2, :], vecT[2:3, :]
    pre_r = dot(x, w1rx[...]) + b1r                  # (TM, De)
    r2x = dot(x, w2rxx[...]) + b2r[...]              # (TM, 2)   layer2 bias folded in
    pre_t = dot(x, w1tx[...]) + b1t                  # (TM, De)
    t2x = dot(x, w2txx[...]) + b2t[...]              # (TM, 58)  layer2 bias folded in

    # ---- batch the 6 modes along sublanes (mode-major rows: [k*TM, (k+1)*TM)) ----
    EP = jnp.concatenate([ep[:, 2 * k:2 * k + 2] for k in range(6)], axis=0)  # (6TM, 2)
    pre_r6 = jnp.concatenate([pre_r] * 6, axis=0)    # (6TM, De)
    r2x6 = jnp.concatenate([r2x] * 6, axis=0)        # (6TM, 2)
    pre_t6 = jnp.concatenate([pre_t] * 6, axis=0)    # (6TM, De)
    t2x6 = jnp.concatenate([t2x] * 6, axis=0)        # (6TM, 58)

    # ---- endpoint_refiner: residual MLP(D+2 -> 2); K=2 parts as VPU rank-1 updates ----
    epx, epy = EP[:, 0:1], EP[:, 1:2]
    hr = pre_r6 + epx * w1re[0:1, :] + epy * w1re[1:2, :]
    hr = jnp.maximum(_ln(hr, lnwr, lnbr), 0.0)
    off = dot(hr, w2rh[...]) + r2x6 + epx * w2rxe[0:1, :] + epy * w2rxe[1:2, :]
    EPn = EP + off                                   # (6TM, 2) refined endpoints

    # ---- get_trajectory: residual MLP(D+2 -> 58) ----
    ex, ey = EPn[:, 0:1], EPn[:, 1:2]
    ht = pre_t6 + ex * w1te[0:1, :] + ey * w1te[1:2, :]
    ht = jnp.maximum(_ln(ht, lnwt, lnbt), 0.0)
    pred = dot(ht, w2th[...]) + t2x6 + ex * w2txe[0:1, :] + ey * w2txe[1:2, :]  # (6TM, 58)

    # ---- direct per-mode stores (no lane interleave inside the kernel) ----
    for k in range(6):
        pred_ref[k] = pred[k * TM:(k + 1) * TM, :].astype(pred_ref.dtype)
        epn_ref[k] = EPn[k * TM:(k + 1) * TM, :].astype(epn_ref.dtype)


def init_params(key, D):
    """Deterministic synthetic parameters for the three residual MLPs."""
    De = D + 2
    keys = iter(jax.random.split(key, 18))

    def rnd(shape, scale=0.1):
        return jax.random.normal(next(keys), shape, jnp.float32) * scale

    def mlp_params(in_dim, out_dim):
        # Stored already transposed as (in, out); layer2 input is cat([h, x]).
        return dict(
            w1=rnd((in_dim, in_dim)),
            b1=rnd((1, in_dim)),
            lnw=rnd((1, in_dim)) + 1.0,
            lnb=rnd((1, in_dim)),
            w2=rnd((2 * in_dim, out_dim)),
            b2=rnd((1, out_dim)),
        )

    return dict(
        ep=mlp_params(D, 6 * 2),        # endpoint_predictor
        ref=mlp_params(De, 2),          # endpoint_refiner
        traj=mlp_params(De, 29 * 2),    # get_trajectory
    )


def trajectory_decoder_future_enhanced(agent_features, params, *, tm=128,
                                       compute_dtype=jnp.float32):
    N, M, D = agent_features.shape
    De = D + 2
    B = N * M
    x = agent_features.reshape(B, D).astype(jnp.float32)

    ep_p, rf, tr = params["ep"], params["ref"], params["traj"]
    # split concatenated-input weights into per-source blocks
    w2eh, w2ex = ep_p["w2"][:D], ep_p["w2"][D:]
    w1rx, w1re = rf["w1"][:D], rf["w1"][D:]
    w2rh, w2rxx, w2rxe = rf["w2"][:De], rf["w2"][De:De + D], rf["w2"][De + D:]
    w1tx, w1te = tr["w1"][:D], tr["w1"][D:]
    w2th, w2txx, w2txe = tr["w2"][:De], tr["w2"][De:De + D], tr["w2"][De + D:]

    # pack per-MLP (1, X) vectors [b1; lnw; lnb] into one (3, X) array each
    vecE = jnp.concatenate([ep_p["b1"], ep_p["lnw"], ep_p["lnb"]], axis=0)
    vecR = jnp.concatenate([rf["b1"], rf["lnw"], rf["lnb"]], axis=0)
    vecT = jnp.concatenate([tr["b1"], tr["lnw"], tr["lnb"]], axis=0)

    param_list = [
        ep_p["w1"], vecE, w2eh, w2ex, ep_p["b2"],
        w1rx, w1re, vecR, w2rh, w2rxx, w2rxe, rf["b2"],
        w1tx, w1te, vecT, w2th, w2txx, w2txe, tr["b2"],
    ]

    # tile size: big rows for MXU fill, padded tail so any N*M works
    tm_eff = max(8, min(tm, _round_up(B, 8)))
    Bp = _round_up(B, tm_eff)
    if Bp != B:
        x = jnp.pad(x, ((0, Bp - B), (0, 0)))
    grid = (Bp // tm_eff,)

    in_specs = [pl.BlockSpec((tm_eff, D), lambda i: (i, 0))]
    in_specs += [pl.BlockSpec(p.shape, lambda i: (0, 0)) for p in param_list]

    out_shapes = (
        jax.ShapeDtypeStruct((6, Bp, 58), jnp.float32),   # trajectories (29x2) per mode
        jax.ShapeDtypeStruct((6, Bp, 2), jnp.float32),    # refined endpoints per mode
    )
    out_specs = (
        pl.BlockSpec((6, tm_eff, 58), lambda i: (0, i, 0)),
        pl.BlockSpec((6, tm_eff, 2), lambda i: (0, i, 0)),
    )

    kernel = functools.partial(_decoder_kernel, compute_dtype=compute_dtype)
    pred, epn = pl.pallas_call(
        kernel,
        out_shape=out_shapes,
        grid=grid,
        in_specs=in_specs,
        out_specs=out_specs,
        compiler_params=pltpu.CompilerParams(dimension_semantics=("parallel",)),
    )(x, *param_list)

    # cheap XLA-side assembly of the PyTorch output convention
    pred = jnp.transpose(pred[:, :B, :], (1, 0, 2)).reshape(N, M, 6, 29, 2)
    epn = jnp.transpose(epn[:, :B, :], (1, 0, 2)).reshape(N, M, 6, 1, 2)
    return jnp.concatenate([pred, epn], axis=-2)          # (N, M, 6, 30, 2)


# ---------------- pure-JAX reference (mirrors the PyTorch forward) ----------------
def _mlp_ref(x, w1, b1, lnw, lnb, w2, b2):
    h = x @ w1 + b1
    mu = h.mean(-1, keepdims=True)
    var = ((h - mu) ** 2).mean(-1, keepdims=True)
    h = (h - mu) / jnp.sqrt(var + LN_EPS) * lnw + lnb
    h = jnp.maximum(h, 0.0)
    return jnp.concatenate([h, x], axis=-1) @ w2 + b2


def reference_forward(agent_features, params):
    N, M, D = agent_features.shape
    endpoints = _mlp_ref(agent_features, **params["ep"]).reshape(N, M, 6, 2)
    afe = jnp.broadcast_to(agent_features[:, :, None, :], (N, M, 6, D))
    offsets = _mlp_ref(jnp.concatenate([afe, endpoints], axis=-1), **params["ref"])
    endpoints = endpoints + offsets
    z = jnp.concatenate([afe, endpoints], axis=-1)
    predictions = _mlp_ref(z, **params["traj"]).reshape(N, M, 6, 29, 2)
    return jnp.concatenate([predictions, endpoints[..., None, :]], axis=-2)


if __name__ == "__main__":
    N, M, D = 2, 8, 32  # hidden_size = 32
    key = jax.random.PRNGKey(0)
    kx, kp = jax.random.split(key)
    agent_features = jax.random.normal(kx, (N, M, D), jnp.float32)
    params = init_params(kp, D)

    ref = reference_forward(agent_features, params)

    # f32 MXU path (exact parity check)
    out = trajectory_decoder_future_enhanced(agent_features, params)
    out = jax.block_until_ready(out)
    assert out.shape == (N, M, 6, 30, 2)
    assert jnp.allclose(out, ref, atol=2e-3, rtol=2e-3), float(jnp.max(jnp.abs(out - ref)))

    # bf16 MXU path (v6e/v7x optimization): f32 accumulate, f32 LayerNorm/elementwise
    out_bf16 = trajectory_decoder_future_enhanced(
        agent_features, params, compute_dtype=jnp.bfloat16)
    out_bf16 = jax.block_until_ready(out_bf16)
    assert jnp.allclose(out_bf16, ref, atol=1e-1, rtol=1e-1), \
        float(jnp.max(jnp.abs(out_bf16 - ref)))

    print("KERNEL_OK")
</pallas_src>

<mosaic_0001>
module attributes {stable_mosaic.version = 11 : i64} {
  func.func @_decoder_kernel(%arg0: i32, %arg1: memref<16x32xf32, #tpu.memory_space<vmem>>, %arg2: memref<32x32xf32, #tpu.memory_space<vmem>>, %arg3: memref<3x32xf32, #tpu.memory_space<vmem>>, %arg4: memref<32x12xf32, #tpu.memory_space<vmem>>, %arg5: memref<32x12xf32, #tpu.memory_space<vmem>>, %arg6: memref<1x12xf32, #tpu.memory_space<vmem>>, %arg7: memref<32x34xf32, #tpu.memory_space<vmem>>, %arg8: memref<2x34xf32, #tpu.memory_space<vmem>>, %arg9: memref<3x34xf32, #tpu.memory_space<vmem>>, %arg10: memref<34x2xf32, #tpu.memory_space<vmem>>, %arg11: memref<32x2xf32, #tpu.memory_space<vmem>>, %arg12: memref<2x2xf32, #tpu.memory_space<vmem>>, %arg13: memref<1x2xf32, #tpu.memory_space<vmem>>, %arg14: memref<32x34xf32, #tpu.memory_space<vmem>>, %arg15: memref<2x34xf32, #tpu.memory_space<vmem>>, %arg16: memref<3x34xf32, #tpu.memory_space<vmem>>, %arg17: memref<34x58xf32, #tpu.memory_space<vmem>>, %arg18: memref<32x58xf32, #tpu.memory_space<vmem>>, %arg19: memref<2x58xf32, #tpu.memory_space<vmem>>, %arg20: memref<1x58xf32, #tpu.memory_space<vmem>>, %arg21: memref<6x16x58xf32, #tpu.memory_space<vmem>>, %arg22: memref<6x16x2xf32, #tpu.memory_space<vmem>>) attributes {dimension_semantics = [#tpu.dimension_semantics<parallel>], iteration_bounds = array<i64: 1>, scalar_prefetch = 0 : i64, scratch_operands = 0 : i64, tpu.core_type = #tpu.core_type<tc>, window_params = [{transform_indices = @transform_0, window_bounds = array<i64: 16, 32>}, {pipeline_mode = #tpu.pipeline_mode<synchronous>, transform_indices = @transform_1, window_bounds = array<i64: 32, 32>}, {pipeline_mode = #tpu.pipeline_mode<synchronous>, transform_indices = @transform_2, window_bounds = array<i64: 3, 32>}, {pipeline_mode = #tpu.pipeline_mode<synchronous>, transform_indices = @transform_3, window_bounds = array<i64: 32, 12>}, {pipeline_mode = #tpu.pipeline_mode<synchronous>, transform_indices = @transform_4, window_bounds = array<i64: 32, 12>}, {pipeline_mode = #tpu.pipeline_mode<synchronous>, transform_indices = @transform_5, window_bounds = array<i64: 1, 12>}, {pipeline_mode = #tpu.pipeline_mode<synchronous>, transform_indices = @transform_6, window_bounds = array<i64: 32, 34>}, {pipeline_mode = #tpu.pipeline_mode<synchronous>, transform_indices = @transform_7, window_bounds = array<i64: 2, 34>}, {pipeline_mode = #tpu.pipeline_mode<synchronous>, transform_indices = @transform_8, window_bounds = array<i64: 3, 34>}, {pipeline_mode = #tpu.pipeline_mode<synchronous>, transform_indices = @transform_9, window_bounds = array<i64: 34, 2>}, {pipeline_mode = #tpu.pipeline_mode<synchronous>, transform_indices = @transform_10, window_bounds = array<i64: 32, 2>}, {pipeline_mode = #tpu.pipeline_mode<synchronous>, transform_indices = @transform_11, window_bounds = array<i64: 2, 2>}, {pipeline_mode = #tpu.pipeline_mode<synchronous>, transform_indices = @transform_12, window_bounds = array<i64: 1, 2>}, {pipeline_mode = #tpu.pipeline_mode<synchronous>, transform_indices = @transform_13, window_bounds = array<i64: 32, 34>}, {pipeline_mode = #tpu.pipeline_mode<synchronous>, transform_indices = @transform_14, window_bounds = array<i64: 2, 34>}, {pipeline_mode = #tpu.pipeline_mode<synchronous>, transform_indices = @transform_15, window_bounds = array<i64: 3, 34>}, {pipeline_mode = #tpu.pipeline_mode<synchronous>, transform_indices = @transform_16, window_bounds = array<i64: 34, 58>}, {pipeline_mode = #tpu.pipeline_mode<synchronous>, transform_indices = @transform_17, window_bounds = array<i64: 32, 58>}, {pipeline_mode = #tpu.pipeline_mode<synchronous>, transform_indices = @transform_18, window_bounds = array<i64: 2, 58>}, {pipeline_mode = #tpu.pipeline_mode<synchronous>, transform_indices = @transform_19, window_bounds = array<i64: 1, 58>}, {transform_indices = @transform_20, window_bounds = array<i64: 6, 16, 58>}, {transform_indices = @transform_21, window_bounds = array<i64: 6, 16, 2>}]} {
    %c0 = arith.constant 0 : index
    %c0_0 = arith.constant 0 : index
    %0 = vector.load %arg1[%c0, %c0_0] : memref<16x32xf32, #tpu.memory_space<vmem>>, vector<16x32xf32>
    %c0_1 = arith.constant 0 : index
    %c0_2 = arith.constant 0 : index
    %1 = vector.load %arg3[%c0_1, %c0_2] : memref<3x32xf32, #tpu.memory_space<vmem>>, vector<1x32xf32>
    %c1 = arith.constant 1 : index
    %c0_3 = arith.constant 0 : index
    %2 = vector.load %arg3[%c1, %c0_3] : memref<3x32xf32, #tpu.memory_space<vmem>>, vector<1x32xf32>
    %c2 = arith.constant 2 : index
    %c0_4 = arith.constant 0 : index
    %3 = vector.load %arg3[%c2, %c0_4] : memref<3x32xf32, #tpu.memory_space<vmem>>, vector<1x32xf32>
    %c0_5 = arith.constant 0 : index
    %c0_6 = arith.constant 0 : index
    %4 = vector.load %arg2[%c0_5, %c0_6] : memref<32x32xf32, #tpu.memory_space<vmem>>, vector<32x32xf32>
    %cst = arith.constant dense<0.000000e+00> : vector<16x32xf32>
    %5 = tpu.matmul %0, %4, %cst {dimension_numbers = #tpu.dot_dimension_numbers<[1], [0], [0], [1], [0, 0, 1, 1], [], []>} : vector<16x32xf32>, vector<32x32xf32>, vector<16x32xf32> -> vector<16x32xf32>
    %6 = vector.broadcast %1 : vector<1x32xf32> to vector<16x32xf32>
    %7 = arith.addf %5, %6 : vector<16x32xf32>
    %cst_7 = arith.constant dense<0.000000e+00> : vector<16xf32>
    %8 = vector.multi_reduction <add>, %7, %cst_7 [1] : vector<16x32xf32> to vector<16xf32>
    %9 = vector.shape_cast %8 : vector<16xf32> to vector<16x1xf32>
    %cst_8 = arith.constant 3.200000e+01 : f32
    %10 = vector.broadcast %cst_8 : f32 to vector<16x1xf32>
    %11 = arith.divf %9, %10 : vector<16x1xf32>
    %12 = vector.broadcast %11 : vector<16x1xf32> to vector<16x32xf32>
    %13 = arith.subf %7, %12 : vector<16x32xf32>
    %14 = arith.mulf %13, %13 : vector<16x32xf32>
    %cst_9 = arith.constant dense<0.000000e+00> : vector<16xf32>
    %15 = vector.multi_reduction <add>, %14, %cst_9 [1] : vector<16x32xf32> to vector<16xf32>
    %16 = vector.shape_cast %15 : vector<16xf32> to vector<16x1xf32>
    %cst_10 = arith.constant 3.200000e+01 : f32
    %17 = vector.broadcast %cst_10 : f32 to vector<16x1xf32>
    %18 = arith.divf %16, %17 : vector<16x1xf32>
    %19 = vector.broadcast %11 : vector<16x1xf32> to vector<16x32xf32>
    %20 = arith.subf %7, %19 : vector<16x32xf32>
    %cst_11 = arith.constant 9.99999974E-6 : f32
    %21 = vector.broadcast %cst_11 : f32 to vector<16x1xf32>
    %22 = arith.addf %18, %21 : vector<16x1xf32>
    %23 = math.rsqrt %22 : vector<16x1xf32>
    %24 = vector.broadcast %23 : vector<16x1xf32> to vector<16x32xf32>
    %25 = arith.mulf %20, %24 : vector<16x32xf32>
    %26 = vector.broadcast %2 : vector<1x32xf32> to vector<16x32xf32>
    %27 = arith.mulf %25, %26 : vector<16x32xf32>
    %28 = vector.broadcast %3 : vector<1x32xf32> to vector<16x32xf32>
    %29 = arith.addf %27, %28 : vector<16x32xf32>
    %cst_12 = arith.constant 0.000000e+00 : f32
    %30 = vector.broadcast %cst_12 : f32 to vector<16x32xf32>
    %31 = arith.maximumf %29, %30 : vector<16x32xf32>
    %c0_13 = arith.constant 0 : index
    %c0_14 = arith.constant 0 : index
    %32 = vector.load %arg4[%c0_13, %c0_14] : memref<32x12xf32, #tpu.memory_space<vmem>>, vector<32x12xf32>
    %cst_15 = arith.constant dense<0.000000e+00> : vector<16x12xf32>
    %33 = tpu.matmul %31, %32, %cst_15 {dimension_numbers = #tpu.dot_dimension_numbers<[1], [0], [0], [1], [0, 0, 1, 1], [], []>} : vector<16x32xf32>, vector<32x12xf32>, vector<16x12xf32> -> vector<16x12xf32>
    %c0_16 = arith.constant 0 : index
    %c0_17 = arith.constant 0 : index
    %34 = vector.load %arg5[%c0_16, %c0_17] : memref<32x12xf32, #tpu.memory_space<vmem>>, vector<32x12xf32>
    %cst_18 = arith.constant dense<0.000000e+00> : vector<16x12xf32>
    %35 = tpu.matmul %0, %34, %cst_18 {dimension_numbers = #tpu.dot_dimension_numbers<[1], [0], [0], [1], [0, 0, 1, 1], [], []>} : vector<16x32xf32>, vector<32x12xf32>, vector<16x12xf32> -> vector<16x12xf32>
    %36 = arith.addf %33, %35 : vector<16x12xf32>
    %c0_19 = arith.constant 0 : index
    %c0_20 = arith.constant 0 : index
    %37 = vector.load %arg6[%c0_19, %c0_20] : memref<1x12xf32, #tpu.memory_space<vmem>>, vector<1x12xf32>
    %38 = vector.broadcast %37 : vector<1x12xf32> to vector<16x12xf32>
    %39 = arith.addf %36, %38 : vector<16x12xf32>
    %c0_21 = arith.constant 0 : index
    %c0_22 = arith.constant 0 : index
    %40 = vector.load %arg9[%c0_21, %c0_22] : memref<3x34xf32, #tpu.memory_space<vmem>>, vector<1x34xf32>
    %c1_23 = arith.constant 1 : index
    %c0_24 = arith.constant 0 : index
    %41 = vector.load %arg9[%c1_23, %c0_24] : memref<3x34xf32, #tpu.memory_space<vmem>>, vector<1x34xf32>
    %c2_25 = arith.constant 2 : index
    %c0_26 = arith.constant 0 : index
    %42 = vector.load %arg9[%c2_25, %c0_26] : memref<3x34xf32, #tpu.memory_space<vmem>>, vector<1x34xf32>
    %c0_27 = arith.constant 0 : index
    %c0_28 = arith.constant 0 : index
    %43 = vector.load %arg16[%c0_27, %c0_28] : memref<3x34xf32, #tpu.memory_space<vmem>>, vector<1x34xf32>
    %c1_29 = arith.constant 1 : index
    %c0_30 = arith.constant 0 : index
    %44 = vector.load %arg16[%c1_29, %c0_30] : memref<3x34xf32, #tpu.memory_space<vmem>>, vector<1x34xf32>
    %c2_31 = arith.constant 2 : index
    %c0_32 = arith.constant 0 : index
    %45 = vector.load %arg16[%c2_31, %c0_32] : memref<3x34xf32, #tpu.memory_space<vmem>>, vector<1x34xf32>
    %c0_33 = arith.constant 0 : index
    %c0_34 = arith.constant 0 : index
    %46 = vector.load %arg7[%c0_33, %c0_34] : memref<32x34xf32, #tpu.memory_space<vmem>>, vector<32x34xf32>
    %cst_35 = arith.constant dense<0.000000e+00> : vector<16x34xf32>
    %47 = tpu.matmul %0, %46, %cst_35 {dimension_numbers = #tpu.dot_dimension_numbers<[1], [0], [0], [1], [0, 0, 1, 1], [], []>} : vector<16x32xf32>, vector<32x34xf32>, vector<16x34xf32> -> vector<16x34xf32>
    %48 = vector.broadcast %40 : vector<1x34xf32> to vector<16x34xf32>
    %49 = arith.addf %47, %48 : vector<16x34xf32>
    %c0_36 = arith.constant 0 : index
    %c0_37 = arith.constant 0 : index
    %50 = vector.load %arg11[%c0_36, %c0_37] : memref<32x2xf32, #tpu.memory_space<vmem>>, vector<32x2xf32>
    %cst_38 = arith.constant dense<0.000000e+00> : vector<16x2xf32>
    %51 = tpu.matmul %0, %50, %cst_38 {dimension_numbers = #tpu.dot_dimension_numbers<[1], [0], [0], [1], [0, 0, 1, 1], [], []>} : vector<16x32xf32>, vector<32x2xf32>, vector<16x2xf32> -> vector<16x2xf32>
    %c0_39 = arith.constant 0 : index
    %c0_40 = arith.constant 0 : index
    %52 = vector.load %arg13[%c0_39, %c0_40] : memref<1x2xf32, #tpu.memory_space<vmem>>, vector<1x2xf32>
    %53 = vector.broadcast %52 : vector<1x2xf32> to vector<16x2xf32>
    %54 = arith.addf %51, %53 : vector<16x2xf32>
    %c0_41 = arith.constant 0 : index
    %c0_42 = arith.constant 0 : index
    %55 = vector.load %arg14[%c0_41, %c0_42] : memref<32x34xf32, #tpu.memory_space<vmem>>, vector<32x34xf32>
    %cst_43 = arith.constant dense<0.000000e+00> : vector<16x34xf32>
    %56 = tpu.matmul %0, %55, %cst_43 {dimension_numbers = #tpu.dot_dimension_numbers<[1], [0], [0], [1], [0, 0, 1, 1], [], []>} : vector<16x32xf32>, vector<32x34xf32>, vector<16x34xf32> -> vector<16x34xf32>
    %57 = vector.broadcast %43 : vector<1x34xf32> to vector<16x34xf32>
    %58 = arith.addf %56, %57 : vector<16x34xf32>
    %c0_44 = arith.constant 0 : index
    %c0_45 = arith.constant 0 : index
    %59 = vector.load %arg18[%c0_44, %c0_45] : memref<32x58xf32, #tpu.memory_space<vmem>>, vector<32x58xf32>
    %cst_46 = arith.constant dense<0.000000e+00> : vector<16x58xf32>
    %60 = tpu.matmul %0, %59, %cst_46 {dimension_numbers = #tpu.dot_dimension_numbers<[1], [0], [0], [1], [0, 0, 1, 1], [], []>} : vector<16x32xf32>, vector<32x58xf32>, vector<16x58xf32> -> vector<16x58xf32>
    %c0_47 = arith.constant 0 : index
    %c0_48 = arith.constant 0 : index
    %61 = vector.load %arg20[%c0_47, %c0_48] : memref<1x58xf32, #tpu.memory_space<vmem>>, vector<1x58xf32>
    %62 = vector.broadcast %61 : vector<1x58xf32> to vector<16x58xf32>
    %63 = arith.addf %60, %62 : vector<16x58xf32>
    %64 = vector.extract_strided_slice %39 {offsets = [0, 0], sizes = [16, 2], strides = [1, 1]} : vector<16x12xf32> to vector<16x2xf32>
    %65 = vector.extract_strided_slice %39 {offsets = [0, 2], sizes = [16, 2], strides = [1, 1]} : vector<16x12xf32> to vector<16x2xf32>
    %66 = vector.extract_strided_slice %39 {offsets = [0, 4], sizes = [16, 2], strides = [1, 1]} : vector<16x12xf32> to vector<16x2xf32>
    %67 = vector.extract_strided_slice %39 {offsets = [0, 6], sizes = [16, 2], strides = [1, 1]} : vector<16x12xf32> to vector<16x2xf32>
    %68 = vector.extract_strided_slice %39 {offsets = [0, 8], sizes = [16, 2], strides = [1, 1]} : vector<16x12xf32> to vector<16x2xf32>
    %69 = vector.extract_strided_slice %39 {offsets = [0, 10], sizes = [16, 2], strides = [1, 1]} : vector<16x12xf32> to vector<16x2xf32>
    %70 = tpu.concatenate %64, %65, %66, %67, %68, %69 in 0 : vector<16x2xf32>, vector<16x2xf32>, vector<16x2xf32>, vector<16x2xf32>, vector<16x2xf32>, vector<16x2xf32> -> vector<96x2xf32>
    %71 = tpu.concatenate %49, %49, %49, %49, %49, %49 in 0 : vector<16x34xf32>, vector<16x34xf32>, vector<16x34xf32>, vector<16x34xf32>, vector<16x34xf32>, vector<16x34xf32> -> vector<96x34xf32>
    %72 = tpu.concatenate %54, %54, %54, %54, %54, %54 in 0 : vector<16x2xf32>, vector<16x2xf32>, vector<16x2xf32>, vector<16x2xf32>, vector<16x2xf32>, vector<16x2xf32> -> vector<96x2xf32>
    %73 = tpu.concatenate %58, %58, %58, %58, %58, %58 in 0 : vector<16x34xf32>, vector<16x34xf32>, vector<16x34xf32>, vector<16x34xf32>, vector<16x34xf32>, vector<16x34xf32> -> vector<96x34xf32>
    %74 = tpu.concatenate %63, %63, %63, %63, %63, %63 in 0 : vector<16x58xf32>, vector<16x58xf32>, vector<16x58xf32>, vector<16x58xf32>, vector<16x58xf32>, vector<16x58xf32> -> vector<96x58xf32>
    %75 = vector.extract_strided_slice %70 {offsets = [0, 0], sizes = [96, 1], strides = [1, 1]} : vector<96x2xf32> to vector<96x1xf32>
    %76 = vector.extract_strided_slice %70 {offsets = [0, 1], sizes = [96, 1], strides = [1, 1]} : vector<96x2xf32> to vector<96x1xf32>
    %c0_49 = arith.constant 0 : index
    %c0_50 = arith.constant 0 : index
    %77 = vector.load %arg8[%c0_49, %c0_50] : memref<2x34xf32, #tpu.memory_space<vmem>>, vector<1x34xf32>
    %78 = vector.broadcast %75 : vector<96x1xf32> to vector<96x34xf32>
    %79 = vector.broadcast %77 : vector<1x34xf32> to vector<96x34xf32>
    %80 = arith.mulf %78, %79 : vector<96x34xf32>
    %81 = arith.addf %71, %80 : vector<96x34xf32>
    %c1_51 = arith.constant 1 : index
    %c0_52 = arith.constant 0 : index
    %82 = vector.load %arg8[%c1_51, %c0_52] : memref<2x34xf32, #tpu.memory_space<vmem>>, vector<1x34xf32>
    %83 = vector.broadcast %76 : vector<96x1xf32> to vector<96x34xf32>
    %84 = vector.broadcast %82 : vector<1x34xf32> to vector<96x34xf32>
    %85 = arith.mulf %83, %84 : vector<96x34xf32>
    %86 = arith.addf %81, %85 : vector<96x34xf32>
    %cst_53 = arith.constant dense<0.000000e+00> : vector<96xf32>
    %87 = vector.multi_reduction <add>, %86, %cst_53 [1] : vector<96x34xf32> to vector<96xf32>
    %88 = vector.shape_cast %87 : vector<96xf32> to vector<96x1xf32>
    %cst_54 = arith.constant 3.400000e+01 : f32
    %89 = vector.broadcast %cst_54 : f32 to vector<96x1xf32>
    %90 = arith.divf %88, %89 : vector<96x1xf32>
    %91 = vector.broadcast %90 : vector<96x1xf32> to vector<96x34xf32>
    %92 = arith.subf %86, %91 : vector<96x34xf32>
    %93 = arith.mulf %92, %92 : vector<96x34xf32>
    %cst_55 = arith.constant dense<0.000000e+00> : vector<96xf32>
    %94 = vector.multi_reduction <add>, %93, %cst_55 [1] : vector<96x34xf32> to vector<96xf32>
    %95 = vector.shape_cast %94 : vector<96xf32> to vector<96x1xf32>
    %cst_56 = arith.constant 3.400000e+01 : f32
    %96 = vector.broadcast %cst_56 : f32 to vector<96x1xf32>
    %97 = arith.divf %95, %96 : vector<96x1xf32>
    %98 = vector.broadcast %90 : vector<96x1xf32> to vector<96x34xf32>
    %99 = arith.subf %86, %98 : vector<96x34xf32>
    %cst_57 = arith.constant 9.99999974E-6 : f32
    %100 = vector.broadcast %cst_57 : f32 to vector<96x1xf32>
    %101 = arith.addf %97, %100 : vector<96x1xf32>
    %102 = math.rsqrt %101 : vector<96x1xf32>
    %103 = vector.broadcast %102 : vector<96x1xf32> to vector<96x34xf32>
    %104 = arith.mulf %99, %103 : vector<96x34xf32>
    %105 = vector.broadcast %41 : vector<1x34xf32> to vector<96x34xf32>
    %106 = arith.mulf %104, %105 : vector<96x34xf32>
    %107 = vector.broadcast %42 : vector<1x34xf32> to vector<96x34xf32>
    %108 = arith.addf %106, %107 : vector<96x34xf32>
    %cst_58 = arith.constant 0.000000e+00 : f32
    %109 = vector.broadcast %cst_58 : f32 to vector<96x34xf32>
    %110 = arith.maximumf %108, %109 : vector<96x34xf32>
    %c0_59 = arith.constant 0 : index
    %c0_60 = arith.constant 0 : index
    %111 = vector.load %arg10[%c0_59, %c0_60] : memref<34x2xf32, #tpu.memory_space<vmem>>, vector<34x2xf32>
    %cst_61 = arith.constant dense<0.000000e+00> : vector<96x2xf32>
    %112 = tpu.matmul %110, %111, %cst_61 {dimension_numbers = #tpu.dot_dimension_numbers<[1], [0], [0], [1], [0, 0, 1, 1], [], []>} : vector<96x34xf32>, vector<34x2xf32>, vector<96x2xf32> -> vector<96x2xf32>
    %113 = arith.addf %112, %72 : vector<96x2xf32>
    %c0_62 = arith.constant 0 : index
    %c0_63 = arith.constant 0 : index
    %114 = vector.load %arg12[%c0_62, %c0_63] : memref<2x2xf32, #tpu.memory_space<vmem>>, vector<1x2xf32>
    %115 = vector.broadcast %75 : vector<96x1xf32> to vector<96x2xf32>
    %116 = vector.broadcast %114 : vector<1x2xf32> to vector<96x2xf32>
    %117 = arith.mulf %115, %116 : vector<96x2xf32>
    %118 = arith.addf %113, %117 : vector<96x2xf32>
    %c1_64 = arith.constant 1 : index
    %c0_65 = arith.constant 0 : index
    %119 = vector.load %arg12[%c1_64, %c0_65] : memref<2x2xf32, #tpu.memory_space<vmem>>, vector<1x2xf32>
    %120 = vector.broadcast %76 : vector<96x1xf32> to vector<96x2xf32>
    %121 = vector.broadcast %119 : vector<1x2xf32> to vector<96x2xf32>
    %122 = arith.mulf %120, %121 : vector<96x2xf32>
    %123 = arith.addf %118, %122 : vector<96x2xf32>
    %124 = arith.addf %70, %123 : vector<96x2xf32>
    %125 = vector.extract_strided_slice %124 {offsets = [0, 0], sizes = [96, 1], strides = [1, 1]} : vector<96x2xf32> to vector<96x1xf32>
    %126 = vector.extract_strided_slice %124 {offsets = [0, 1], sizes = [96, 1], strides = [1, 1]} : vector<96x2xf32> to vector<96x1xf32>
    %c0_66 = arith.constant 0 : index
    %c0_67 = arith.constant 0 : index
    %127 = vector.load %arg15[%c0_66, %c0_67] : memref<2x34xf32, #tpu.memory_space<vmem>>, vector<1x34xf32>
    %128 = vector.broadcast %125 : vector<96x1xf32> to vector<96x34xf32>
    %129 = vector.broadcast %127 : vector<1x34xf32> to vector<96x34xf32>
    %130 = arith.mulf %128, %129 : vector<96x34xf32>
    %131 = arith.addf %73, %130 : vector<96x34xf32>
    %c1_68 = arith.constant 1 : index
    %c0_69 = arith.constant 0 : index
    %132 = vector.load %arg15[%c1_68, %c0_69] : memref<2x34xf32, #tpu.memory_space<vmem>>, vector<1x34xf32>
    %133 = vector.broadcast %126 : vector<96x1xf32> to vector<96x34xf32>
    %134 = vector.broadcast %132 : vector<1x34xf32> to vector<96x34xf32>
    %135 = arith.mulf %133, %134 : vector<96x34xf32>
    %136 = arith.addf %131, %135 : vector<96x34xf32>
    %cst_70 = arith.constant dense<0.000000e+00> : vector<96xf32>
    %137 = vector.multi_reduction <add>, %136, %cst_70 [1] : vector<96x34xf32> to vector<96xf32>
    %138 = vector.shape_cast %137 : vector<96xf32> to vector<96x1xf32>
    %cst_71 = arith.constant 3.400000e+01 : f32
    %139 = vector.broadcast %cst_71 : f32 to vector<96x1xf32>
    %140 = arith.divf %138, %139 : vector<96x1xf32>
    %141 = vector.broadcast %140 : vector<96x1xf32> to vector<96x34xf32>
    %142 = arith.subf %136, %141 : vector<96x34xf32>
    %143 = arith.mulf %142, %142 : vector<96x34xf32>
    %cst_72 = arith.constant dense<0.000000e+00> : vector<96xf32>
    %144 = vector.multi_reduction <add>, %143, %cst_72 [1] : vector<96x34xf32> to vector<96xf32>
    %145 = vector.shape_cast %144 : vector<96xf32> to vector<96x1xf32>
    %cst_73 = arith.constant 3.400000e+01 : f32
    %146 = vector.broadcast %cst_73 : f32 to vector<96x1xf32>
    %147 = arith.divf %145, %146 : vector<96x1xf32>
    %148 = vector.broadcast %140 : vector<96x1xf32> to vector<96x34xf32>
    %149 = arith.subf %136, %148 : vector<96x34xf32>
    %cst_74 = arith.constant 9.99999974E-6 : f32
    %150 = vector.broadcast %cst_74 : f32 to vector<96x1xf32>
    %151 = arith.addf %147, %150 : vector<96x1xf32>
    %152 = math.rsqrt %151 : vector<96x1xf32>
    %153 = vector.broadcast %152 : vector<96x1xf32> to vector<96x34xf32>
    %154 = arith.mulf %149, %153 : vector<96x34xf32>
    %155 = vector.broadcast %44 : vector<1x34xf32> to vector<96x34xf32>
    %156 = arith.mulf %154, %155 : vector<96x34xf32>
    %157 = vector.broadcast %45 : vector<1x34xf32> to vector<96x34xf32>
    %158 = arith.addf %156, %157 : vector<96x34xf32>
    %cst_75 = arith.constant 0.000000e+00 : f32
    %159 = vector.broadcast %cst_75 : f32 to vector<96x34xf32>
    %160 = arith.maximumf %158, %159 : vector<96x34xf32>
    %c0_76 = arith.constant 0 : index
    %c0_77 = arith.constant 0 : index
    %161 = vector.load %arg17[%c0_76, %c0_77] : memref<34x58xf32, #tpu.memory_space<vmem>>, vector<34x58xf32>
    %cst_78 = arith.constant dense<0.000000e+00> : vector<96x58xf32>
    %162 = tpu.matmul %160, %161, %cst_78 {dimension_numbers = #tpu.dot_dimension_numbers<[1], [0], [0], [1], [0, 0, 1, 1], [], []>} : vector<96x34xf32>, vector<34x58xf32>, vector<96x58xf32> -> vector<96x58xf32>
    %163 = arith.addf %162, %74 : vector<96x58xf32>
    %c0_79 = arith.constant 0 : index
    %c0_80 = arith.constant 0 : index
    %164 = vector.load %arg19[%c0_79, %c0_80] : memref<2x58xf32, #tpu.memory_space<vmem>>, vector<1x58xf32>
    %165 = vector.broadcast %125 : vector<96x1xf32> to vector<96x58xf32>
    %166 = vector.broadcast %164 : vector<1x58xf32> to vector<96x58xf32>
    %167 = arith.mulf %165, %166 : vector<96x58xf32>
    %168 = arith.addf %163, %167 : vector<96x58xf32>
    %c1_81 = arith.constant 1 : index
    %c0_82 = arith.constant 0 : index
    %169 = vector.load %arg19[%c1_81, %c0_82] : memref<2x58xf32, #tpu.memory_space<vmem>>, vector<1x58xf32>
    %170 = vector.broadcast %126 : vector<96x1xf32> to vector<96x58xf32>
    %171 = vector.broadcast %169 : vector<1x58xf32> to vector<96x58xf32>
    %172 = arith.mulf %170, %171 : vector<96x58xf32>
    %173 = arith.addf %168, %172 : vector<96x58xf32>
    %174 = vector.extract_strided_slice %173 {offsets = [0, 0], sizes = [16, 58], strides = [1, 1]} : vector<96x58xf32> to vector<16x58xf32>
    %c0_83 = arith.constant 0 : index
    %c0_84 = arith.constant 0 : index
    %c0_85 = arith.constant 0 : index
    %175 = vector.load %arg21[%c0_83, %c0_84, %c0_85] : memref<6x16x58xf32, #tpu.memory_space<vmem>>, vector<1x16x58xf32>
    %176 = vector.shape_cast %175 : vector<1x16x58xf32> to vector<16x58xf32>
    %177 = vector.shape_cast %174 : vector<16x58xf32> to vector<1x16x58xf32>
    tpu.vector_store %arg21[%c0_83, %c0_84, %c0_85], %177 {strides = array<i32>} : memref<6x16x58xf32, #tpu.memory_space<vmem>>, vector<1x16x58xf32>,
    %178 = vector.extract_strided_slice %124 {offsets = [0, 0], sizes = [16, 2], strides = [1, 1]} : vector<96x2xf32> to vector<16x2xf32>
    %c0_86 = arith.constant 0 : index
    %c0_87 = arith.constant 0 : index
    %c0_88 = arith.constant 0 : index
    %179 = vector.load %arg22[%c0_86, %c0_87, %c0_88] : memref<6x16x2xf32, #tpu.memory_space<vmem>>, vector<1x16x2xf32>
    %180 = vector.shape_cast %179 : vector<1x16x2xf32> to vector<16x2xf32>
    %181 = vector.shape_cast %178 : vector<16x2xf32> to vector<1x16x2xf32>
    tpu.vector_store %arg22[%c0_86, %c0_87, %c0_88], %181 {strides = array<i32>} : memref<6x16x2xf32, #tpu.memory_space<vmem>>, vector<1x16x2xf32>,
    %182 = vector.extract_strided_slice %173 {offsets = [16, 0], sizes = [16, 58], strides = [1, 1]} : vector<96x58xf32> to vector<16x58xf32>
    %c1_89 = arith.constant 1 : index
    %c0_90 = arith.constant 0 : index
    %c0_91 = arith.constant 0 : index
    %183 = vector.load %arg21[%c1_89, %c0_90, %c0_91] : memref<6x16x58xf32, #tpu.memory_space<vmem>>, vector<1x16x58xf32>
    %184 = vector.shape_cast %183 : vector<1x16x58xf32> to vector<16x58xf32>
    %185 = vector.shape_cast %182 : vector<16x58xf32> to vector<1x16x58xf32>
    tpu.vector_store %arg21[%c1_89, %c0_90, %c0_91], %185 {strides = array<i32>} : memref<6x16x58xf32, #tpu.memory_space<vmem>>, vector<1x16x58xf32>,
    %186 = vector.extract_strided_slice %124 {offsets = [16, 0], sizes = [16, 2], strides = [1, 1]} : vector<96x2xf32> to vector<16x2xf32>
    %c1_92 = arith.constant 1 : index
    %c0_93 = arith.constant 0 : index
    %c0_94 = arith.constant 0 : index
    %187 = vector.load %arg22[%c1_92, %c0_93, %c0_94] : memref<6x16x2xf32, #tpu.memory_space<vmem>>, vector<1x16x2xf32>
    %188 = vector.shape_cast %187 : vector<1x16x2xf32> to vector<16x2xf32>
    %189 = vector.shape_cast %186 : vector<16x2xf32> to vector<1x16x2xf32>
    tpu.vector_store %arg22[%c1_92, %c0_93, %c0_94], %189 {strides = array<i32>} : memref<6x16x2xf32, #tpu.memory_space<vmem>>, vector<1x16x2xf32>,
    %190 = vector.extract_strided_slice %173 {offsets = [32, 0], sizes = [16, 58], strides = [1, 1]} : vector<96x58xf32> to vector<16x58xf32>
    %c2_95 = arith.constant 2 : index
    %c0_96 = arith.constant 0 : index
    %c0_97 = arith.constant 0 : index
    %191 = vector.load %arg21[%c2_95, %c0_96, %c0_97] : memref<6x16x58xf32, #tpu.memory_space<vmem>>, vector<1x16x58xf32>
    %192 = vector.shape_cast %191 : vector<1x16x58xf32> to vector<16x58xf32>
    %193 = vector.shape_cast %190 : vector<16x58xf32> to vector<1x16x58xf32>
    tpu.vector_store %arg21[%c2_95, %c0_96, %c0_97], %193 {strides = array<i32>} : memref<6x16x58xf32, #tpu.memory_space<vmem>>, vector<1x16x58xf32>,
    %194 = vector.extract_strided_slice %124 {offsets = [32, 0], sizes = [16, 2], strides = [1, 1]} : vector<96x2xf32> to vector<16x2xf32>
    %c2_98 = arith.constant 2 : index
    %c0_99 = arith.constant 0 : index
    %c0_100 = arith.constant 0 : index
    %195 = vector.load %arg22[%c2_98, %c0_99, %c0_100] : memref<6x16x2xf32, #tpu.memory_space<vmem>>, vector<1x16x2xf32>
    %196 = vector.shape_cast %195 : vector<1x16x2xf32> to vector<16x2xf32>
    %197 = vector.shape_cast %194 : vector<16x2xf32> to vector<1x16x2xf32>
    tpu.vector_store %arg22[%c2_98, %c0_99, %c0_100], %197 {strides = array<i32>} : memref<6x16x2xf32, #tpu.memory_space<vmem>>, vector<1x16x2xf32>,
    %198 = vector.extract_strided_slice %173 {offsets = [48, 0], sizes = [16, 58], strides = [1, 1]} : vector<96x58xf32> to vector<16x58xf32>
    %c3 = arith.constant 3 : index
    %c0_101 = arith.constant 0 : index
    %c0_102 = arith.constant 0 : index
    %199 = vector.load %arg21[%c3, %c0_101, %c0_102] : memref<6x16x58xf32, #tpu.memory_space<vmem>>, vector<1x16x58xf32>
    %200 = vector.shape_cast %199 : vector<1x16x58xf32> to vector<16x58xf32>
    %201 = vector.shape_cast %198 : vector<16x58xf32> to vector<1x16x58xf32>
    tpu.vector_store %arg21[%c3, %c0_101, %c0_102], %201 {strides = array<i32>} : memref<6x16x58xf32, #tpu.memory_space<vmem>>, vector<1x16x58xf32>,
    %202 = vector.extract_strided_slice %124 {offsets = [48, 0], sizes = [16, 2], strides = [1, 1]} : vector<96x2xf32> to vector<16x2xf32>
    %c3_103 = arith.constant 3 : index
    %c0_104 = arith.constant 0 : index
    %c0_105 = arith.constant 0 : index
    %203 = vector.load %arg22[%c3_103, %c0_104, %c0_105] : memref<6x16x2xf32, #tpu.memory_space<vmem>>, vector<1x16x2xf32>
    %204 = vector.shape_cast %203 : vector<1x16x2xf32> to vector<16x2xf32>
    %205 = vector.shape_cast %202 : vector<16x2xf32> to vector<1x16x2xf32>
    tpu.vector_store %arg22[%c3_103, %c0_104, %c0_105], %205 {strides = array<i32>} : memref<6x16x2xf32, #tpu.memory_space<vmem>>, vector<1x16x2xf32>,
    %206 = vector.extract_strided_slice %173 {offsets = [64, 0], sizes = [16, 58], strides = [1, 1]} : vector<96x58xf32> to vector<16x58xf32>
    %c4 = arith.constant 4 : index
    %c0_106 = arith.constant 0 : index
    %c0_107 = arith.constant 0 : index
    %207 = vector.load %arg21[%c4, %c0_106, %c0_107] : memref<6x16x58xf32, #tpu.memory_space<vmem>>, vector<1x16x58xf32>
    %208 = vector.shape_cast %207 : vector<1x16x58xf32> to vector<16x58xf32>
    %209 = vector.shape_cast %206 : vector<16x58xf32> to vector<1x16x58xf32>
    tpu.vector_store %arg21[%c4, %c0_106, %c0_107], %209 {strides = array<i32>} : memref<6x16x58xf32, #tpu.memory_space<vmem>>, vector<1x16x58xf32>,
    %210 = vector.extract_strided_slice %124 {offsets = [64, 0], sizes = [16, 2], strides = [1, 1]} : vector<96x2xf32> to vector<16x2xf32>
    %c4_108 = arith.constant 4 : index
    %c0_109 = arith.constant 0 : index
    %c0_110 = arith.constant 0 : index
    %211 = vector.load %arg22[%c4_108, %c0_109, %c0_110] : memref<6x16x2xf32, #tpu.memory_space<vmem>>, vector<1x16x2xf32>
    %212 = vector.shape_cast %211 : vector<1x16x2xf32> to vector<16x2xf32>
    %213 = vector.shape_cast %210 : vector<16x2xf32> to vector<1x16x2xf32>
    tpu.vector_store %arg22[%c4_108, %c0_109, %c0_110], %213 {strides = array<i32>} : memref<6x16x2xf32, #tpu.memory_space<vmem>>, vector<1x16x2xf32>,
    %214 = vector.extract_strided_slice %173 {offsets = [80, 0], sizes = [16, 58], strides = [1, 1]} : vector<96x58xf32> to vector<16x58xf32>
    %c5 = arith.constant 5 : index
    %c0_111 = arith.constant 0 : index
    %c0_112 = arith.constant 0 : index
    %215 = vector.load %arg21[%c5, %c0_111, %c0_112] : memref<6x16x58xf32, #tpu.memory_space<vmem>>, vector<1x16x58xf32>
    %216 = vector.shape_cast %215 : vector<1x16x58xf32> to vector<16x58xf32>
    %217 = vector.shape_cast %214 : vector<16x58xf32> to vector<1x16x58xf32>
    tpu.vector_store %arg21[%c5, %c0_111, %c0_112], %217 {strides = array<i32>} : memref<6x16x58xf32, #tpu.memory_space<vmem>>, vector<1x16x58xf32>,
    %218 = vector.extract_strided_slice %124 {offsets = [80, 0], sizes = [16, 2], strides = [1, 1]} : vector<96x2xf32> to vector<16x2xf32>
    %c5_113 = arith.constant 5 : index
    %c0_114 = arith.constant 0 : index
    %c0_115 = arith.constant 0 : index
    %219 = vector.load %arg22[%c5_113, %c0_114, %c0_115] : memref<6x16x2xf32, #tpu.memory_space<vmem>>, vector<1x16x2xf32>
    %220 = vector.shape_cast %219 : vector<1x16x2xf32> to vector<16x2xf32>
    %221 = vector.shape_cast %218 : vector<16x2xf32> to vector<1x16x2xf32>
    tpu.vector_store %arg22[%c5_113, %c0_114, %c0_115], %221 {strides = array<i32>} : memref<6x16x2xf32, #tpu.memory_space<vmem>>, vector<1x16x2xf32>,
    return
  }
  func.func @transform_0(%arg0: i32) -> (i32, i32) {
    %c0_i32 = arith.constant 0 : i32
    %c0_i32_0 = arith.constant 0 : i32
    return %arg0, %c0_i32 : i32, i32
  }
  func.func @transform_1(%arg0: i32) -> (i32, i32) {
    %c0_i32 = arith.constant 0 : i32
    %c0_i32_0 = arith.constant 0 : i32
    %c0_i32_1 = arith.constant 0 : i32
    return %c0_i32, %c0_i32_0 : i32, i32
  }
  func.func @transform_2(%arg0: i32) -> (i32, i32) {
    %c0_i32 = arith.constant 0 : i32
    %c0_i32_0 = arith.constant 0 : i32
    %c0_i32_1 = arith.constant 0 : i32
    return %c0_i32, %c0_i32_0 : i32, i32
  }
  func.func @transform_3(%arg0: i32) -> (i32, i32) {
    %c0_i32 = arith.constant 0 : i32
    %c0_i32_0 = arith.constant 0 : i32
    %c0_i32_1 = arith.constant 0 : i32
    return %c0_i32, %c0_i32_0 : i32, i32
  }
  func.func @transform_4(%arg0: i32) -> (i32, i32) {
    %c0_i32 = arith.constant 0 : i32
    %c0_i32_0 = arith.constant 0 : i32
    %c0_i32_1 = arith.constant 0 : i32
    return %c0_i32, %c0_i32_0 : i32, i32
  }
  func.func @transform_5(%arg0: i32) -> (i32, i32) {
    %c0_i32 = arith.constant 0 : i32
    %c0_i32_0 = arith.constant 0 : i32
    %c0_i32_1 = arith.constant 0 : i32
    return %c0_i32, %c0_i32_0 : i32, i32
  }
  func.func @transform_6(%arg0: i32) -> (i32, i32) {
    %c0_i32 = arith.constant 0 : i32
    %c0_i32_0 = arith.constant 0 : i32
    %c0_i32_1 = arith.constant 0 : i32
    return %c0_i32, %c0_i32_0 : i32, i32
  }
  func.func @transform_7(%arg0: i32) -> (i32, i32) {
    %c0_i32 = arith.constant 0 : i32
    %c0_i32_0 = arith.constant 0 : i32
    %c0_i32_1 = arith.constant 0 : i32
    return %c0_i32, %c0_i32_0 : i32, i32
  }
  func.func @transform_8(%arg0: i32) -> (i32, i32) {
    %c0_i32 = arith.constant 0 : i32
    %c0_i32_0 = arith.constant 0 : i32
    %c0_i32_1 = arith.constant 0 : i32
    return %c0_i32, %c0_i32_0 : i32, i32
  }
  func.func @transform_9(%arg0: i32) -> (i32, i32) {
    %c0_i32 = arith.constant 0 : i32
    %c0_i32_0 = arith.constant 0 : i32
    %c0_i32_1 = arith.constant 0 : i32
    return %c0_i32, %c0_i32_0 : i32, i32
  }
  func.func @transform_10(%arg0: i32) -> (i32, i32) {
    %c0_i32 = arith.constant 0 : i32
    %c0_i32_0 = arith.constant 0 : i32
    %c0_i32_1 = arith.constant 0 : i32
    return %c0_i32, %c0_i32_0 : i32, i32
  }
  func.func @transform_11(%arg0: i32) -> (i32, i32) {
    %c0_i32 = arith.constant 0 : i32
    %c0_i32_0 = arith.constant 0 : i32
    %c0_i32_1 = arith.constant 0 : i32
    return %c0_i32, %c0_i32_0 : i32, i32
  }
  func.func @transform_12(%arg0: i32) -> (i32, i32) {
    %c0_i32 = arith.constant 0 : i32
    %c0_i32_0 = arith.constant 0 : i32
    %c0_i32_1 = arith.constant 0 : i32
    return %c0_i32, %c0_i32_0 : i32, i32
  }
  func.func @transform_13(%arg0: i32) -> (i32, i32) {
    %c0_i32 = arith.constant 0 : i32
    %c0_i32_0 = arith.constant 0 : i32
    %c0_i32_1 = arith.constant 0 : i32
    return %c0_i32, %c0_i32_0 : i32, i32
  }
  func.func @transform_14(%arg0: i32) -> (i32, i32) {
    %c0_i32 = arith.constant 0 : i32
    %c0_i32_0 = arith.constant 0 : i32
    %c0_i32_1 = arith.constant 0 : i32
    return %c0_i32, %c0_i32_0 : i32, i32
  }
  func.func @transform_15(%arg0: i32) -> (i32, i32) {
    %c0_i32 = arith.constant 0 : i32
    %c0_i32_0 = arith.constant 0 : i32
    %c0_i32_1 = arith.constant 0 : i32
    return %c0_i32, %c0_i32_0 : i32, i32
  }
  func.func @transform_16(%arg0: i32) -> (i32, i32) {
    %c0_i32 = arith.constant 0 : i32
    %c0_i32_0 = arith.constant 0 : i32
    %c0_i32_1 = arith.constant 0 : i32
    return %c0_i32, %c0_i32_0 : i32, i32
  }
  func.func @transform_17(%arg0: i32) -> (i32, i32) {
    %c0_i32 = arith.constant 0 : i32
    %c0_i32_0 = arith.constant 0 : i32
    %c0_i32_1 = arith.constant 0 : i32
    return %c0_i32, %c0_i32_0 : i32, i32
  }
  func.func @transform_18(%arg0: i32) -> (i32, i32) {
    %c0_i32 = arith.constant 0 : i32
    %c0_i32_0 = arith.constant 0 : i32
    %c0_i32_1 = arith.constant 0 : i32
    return %c0_i32, %c0_i32_0 : i32, i32
  }
  func.func @transform_19(%arg0: i32) -> (i32, i32) {
    %c0_i32 = arith.constant 0 : i32
    %c0_i32_0 = arith.constant 0 : i32
    %c0_i32_1 = arith.constant 0 : i32
    return %c0_i32, %c0_i32_0 : i32, i32
  }
  func.func @transform_20(%arg0: i32) -> (i32, i32, i32) {
    %c0_i32 = arith.constant 0 : i32
    %c0_i32_0 = arith.constant 0 : i32
    %c0_i32_1 = arith.constant 0 : i32
    return %c0_i32, %arg0, %c0_i32_0 : i32, i32, i32
  }
  func.func @transform_21(%arg0: i32) -> (i32, i32, i32) {
    %c0_i32 = arith.constant 0 : i32
    %c0_i32_0 = arith.constant 0 : i32
    %c0_i32_1 = arith.constant 0 : i32
    return %c0_i32, %arg0, %c0_i32_0 : i32, i32, i32
  }
}

</mosaic_0001>

<llo_original>
// kernel: tpu_custom_call.1
$region0: #{tpu_custom_call.1}
  #allocation0 [shape = 'u32[]', space=smem, size = 0x4, offset = 0x4, fixed_abs, tag = 'smem constant byte address 0x4 - core index']
  #allocation1 [shape = 'u32[144,128]{1,0:T(1,128)}', space=vmem, size = 0x12000, scoped, tag = 'internal scratch']
  %s0 = inlined_call_operand.hbm [shape: f32[16,32], index: 0, kind: input, shape index: {}]
  %s1 = inlined_call_operand.vmem [shape: f32[32,32], index: 1, kind: input, shape index: {}]
  %s2 = inlined_call_operand.hbm [shape: f32[3,32], index: 2, kind: input, shape index: {}]
  %s3 = inlined_call_operand.vmem [shape: f32[32,12], index: 3, kind: input, shape index: {}]
  %s4 = inlined_call_operand.vmem [shape: f32[32,12], index: 4, kind: input, shape index: {}]
  %s5 = inlined_call_operand.hbm [shape: f32[1,12], index: 5, kind: input, shape index: {}]
  %s6 = inlined_call_operand.vmem [shape: f32[32,34], index: 6, kind: input, shape index: {}]
  %s7 = inlined_call_operand.vmem [shape: f32[2,34], index: 7, kind: input, shape index: {}]
  %s8 = inlined_call_operand.vmem [shape: f32[3,34], index: 8, kind: input, shape index: {}]
  %s9 = inlined_call_operand.vmem [shape: f32[34,2], index: 9, kind: input, shape index: {}]
  %s10 = inlined_call_operand.vmem [shape: f32[32,2], index: 10, kind: input, shape index: {}]
  %s11 = inlined_call_operand.vmem [shape: f32[2,2], index: 11, kind: input, shape index: {}]
  %s12 = inlined_call_operand.vmem [shape: f32[1,2], index: 12, kind: input, shape index: {}]
  %s13 = inlined_call_operand.vmem [shape: f32[32,34], index: 13, kind: input, shape index: {}]
  %s14 = inlined_call_operand.vmem [shape: f32[2,34], index: 14, kind: input, shape index: {}]
  %s15 = inlined_call_operand.vmem [shape: f32[3,34], index: 15, kind: input, shape index: {}]
  %s16 = inlined_call_operand.vmem [shape: f32[34,58], index: 16, kind: input, shape index: {}]
  %s17 = inlined_call_operand.vmem [shape: f32[32,58], index: 17, kind: input, shape index: {}]
  %s18 = inlined_call_operand.vmem [shape: f32[2,58], index: 18, kind: input, shape index: {}]
  %s19 = inlined_call_operand.vmem [shape: f32[1,58], index: 19, kind: input, shape index: {}]
  %s20 = inlined_call_operand.hbm [shape: f32[6,16,58], index: 20, kind: output, shape index: {0}]
  %s21 = inlined_call_operand.vmem [shape: f32[6,16,2], index: 21, kind: output, shape index: {1}]
  %22 = xla_tuple %s20, %s21
  %s23 = sld [smem:[#allocation0]]
  $region110: #{tpu_custom_call.1} parent=0
    _
  %s25 = ssub.s32 1, %s23
  %s26 = scalar_select 0, %s25, %s23
  $region1: #{tpu_custom_call.1} parent=0
    #allocation2 [shape = 'u8[8192]{0}', space=vmem, size = 0x2000, scoped, tag = 'input window, operand 0, single buffered']
    #allocation3 [shape = 's32[1]{0}', space=sflag, size = 0x4, scoped, tag = 'scoped memory for tpu_custom_call.1']
    #allocation4 [shape = 's32[1]{0}', space=sflag, size = 0x4, scoped, tag = 'scoped memory for tpu_custom_call.1']
    #allocation5 [shape = 'u8[2048]{0}', space=vmem, size = 0x800, scoped, tag = 'input window, operand 2, single buffered']
    #allocation6 [shape = 's32[1]{0}', space=sflag, size = 0x4, scoped, tag = 'scoped memory for tpu_custom_call.1']
    #allocation7 [shape = 'u8[512]{0}', space=vmem, size = 0x400, scoped, tag = 'input window, operand 5, single buffered']
    #allocation8 [shape = 'u8[49152]{0}', space=vmem, size = 0xc000, scoped, tag = 'output window, operand 0, single buffered']
    %27 = vsyncpa [#allocation3], 0
    %28 = vsyncpa [#allocation6], 0
    %29 = vsyncpa [#allocation4], 0
    // Predicated region
    $region2: #{tpu_custom_call.1} parent=1 // pred_check
      _
    $region3: #{tpu_custom_call.1} parent=1 // pred_check_branch
      %31 = sbr.rel (0) target = $region5
    $region4: #{tpu_custom_call.1} parent=1 // pred_region
      %s33 = ssub.s32 256, 256
      %34 = vsyncadd [#allocation3], %s33
      %s35 = sshll.u32 [#allocation2], 4
      %s36 = int_to_ptr.vmem [resolvable:$true] %s35
      %41 = dma.hbm_to_vmem [thread:$0]  %s0, 256, %s36, [#allocation3], 128, 128, 8
    $region5: #{tpu_custom_call.1} parent=1 // pred_fallthru
      _
    // Predicated region
    $region6: #{tpu_custom_call.1} parent=1 // pred_check
      _
    $region7: #{tpu_custom_call.1} parent=1 // pred_check_branch
      %43 = sbr.rel (0) target = $region9
    $region8: #{tpu_custom_call.1} parent=1 // pred_region
      _
    $region9: #{tpu_custom_call.1} parent=1 // pred_fallthru
      _
    // Predicated region
    $region10: #{tpu_custom_call.1} parent=1 // pred_check
      _
    $region11: #{tpu_custom_call.1} parent=1 // pred_check_branch
      %45 = sbr.rel (0) target = $region13
    $region12: #{tpu_custom_call.1} parent=1 // pred_region
      %s47 = ssub.s32 64, 64
      %48 = vsyncadd [#allocation6], %s47
      %s50 = sshll.u32 [#allocation5], 4
      %s51 = int_to_ptr.vmem [resolvable:$true] %s50
      %53 = dma.hbm_to_vmem [thread:$0]  %s2, 64, %s51, [#allocation6]
    $region13: #{tpu_custom_call.1} parent=1 // pred_fallthru
      _
    // Predicated region
    $region14: #{tpu_custom_call.1} parent=1 // pred_check
      _
    $region15: #{tpu_custom_call.1} parent=1 // pred_check_branch
      %55 = sbr.rel (0) target = $region17
    $region16: #{tpu_custom_call.1} parent=1 // pred_region
      _
    $region17: #{tpu_custom_call.1} parent=1 // pred_fallthru
      _
    // Predicated region
    $region18: #{tpu_custom_call.1} parent=1 // pred_check
      _
    $region19: #{tpu_custom_call.1} parent=1 // pred_check_branch
      %57 = sbr.rel (0) target = $region21
    $region20: #{tpu_custom_call.1} parent=1 // pred_region
      _
    $region21: #{tpu_custom_call.1} parent=1 // pred_fallthru
      _
    // Predicated region
    $region22: #{tpu_custom_call.1} parent=1 // pred_check
      _
    $region23: #{tpu_custom_call.1} parent=1 // pred_check_branch
      %59 = sbr.rel (0) target = $region25
    $region24: #{tpu_custom_call.1} parent=1 // pred_region
      %s61 = ssub.s32 16, 16
      %62 = vsyncadd [#allocation6], %s61
      %s64 = sshll.u32 [#allocation7], 4
      %s65 = int_to_ptr.vmem [resolvable:$true] %s64
      %67 = dma.hbm_to_vmem [thread:$0]  %s5, 16, %s65, [#allocation6]
    $region25: #{tpu_custom_call.1} parent=1 // pred_fallthru
      _
    // Predicated region
    $region26: #{tpu_custom_call.1} parent=1 // pred_check
      _
    $region27: #{tpu_custom_call.1} parent=1 // pred_check_branch
      %69 = sbr.rel (0) target = $region29
    $region28: #{tpu_custom_call.1} parent=1 // pred_region
      _
    $region29: #{tpu_custom_call.1} parent=1 // pred_fallthru
      _
    // Predicated region
    $region30: #{tpu_custom_call.1} parent=1 // pred_check
      _
    $region31: #{tpu_custom_call.1} parent=1 // pred_check_branch
      %71 = sbr.rel (0) target = $region33
    $region32: #{tpu_custom_call.1} parent=1 // pred_region
      _
    $region33: #{tpu_custom_call.1} parent=1 // pred_fallthru
      _
    // Predicated region
    $region34: #{tpu_custom_call.1} parent=1 // pred_check
      _
    $region35: #{tpu_custom_call.1} parent=1 // pred_check_branch
      %73 = sbr.rel (0) target = $region37
    $region36: #{tpu_custom_call.1} parent=1 // pred_region
      _
    $region37: #{tpu_custom_call.1} parent=1 // pred_fallthru
      _
    // Predicated region
    $region38: #{tpu_custom_call.1} parent=1 // pred_check
      _
    $region39: #{tpu_custom_call.1} parent=1 // pred_check_branch
      %75 = sbr.rel (0) target = $region41
    $region40: #{tpu_custom_call.1} parent=1 // pred_region
      _
    $region41: #{tpu_custom_call.1} parent=1 // pred_fallthru
      _
    // Predicated region
    $region42: #{tpu_custom_call.1} parent=1 // pred_check
      _
    $region43: #{tpu_custom_call.1} parent=1 // pred_check_branch
      %77 = sbr.rel (0) target = $region45
    $region44: #{tpu_custom_call.1} parent=1 // pred_region
      _
    $region45: #{tpu_custom_call.1} parent=1 // pred_fallthru
      _
    // Predicated region
    $region46: #{tpu_custom_call.1} parent=1 // pred_check
      _
    $region47: #{tpu_custom_call.1} parent=1 // pred_check_branch
      %79 = sbr.rel (0) target = $region49
    $region48: #{tpu_custom_call.1} parent=1 // pred_region
      _
    $region49: #{tpu_custom_call.1} parent=1 // pred_fallthru
      _
    // Predicated region
    $region50: #{tpu_custom_call.1} parent=1 // pred_check
      _
    $region51: #{tpu_custom_call.1} parent=1 // pred_check_branch
      %81 = sbr.rel (0) target = $region53
    $region52: #{tpu_custom_call.1} parent=1 // pred_region
      _
    $region53: #{tpu_custom_call.1} parent=1 // pred_fallthru
      _
    // Predicated region
    $region54: #{tpu_custom_call.1} parent=1 // pred_check
      _
    $region55: #{tpu_custom_call.1} parent=1 // pred_check_branch
      %83 = sbr.rel (0) target = $region57
    $region56: #{tpu_custom_call.1} parent=1 // pred_region
      _
    $region57: #{tpu_custom_call.1} parent=1 // pred_fallthru
      _
    // Predicated region
    $region58: #{tpu_custom_call.1} parent=1 // pred_check
      _
    $region59: #{tpu_custom_call.1} parent=1 // pred_check_branch
      %85 = sbr.rel (0) target = $region61
    $region60: #{tpu_custom_call.1} parent=1 // pred_region
      _
    $region61: #{tpu_custom_call.1} parent=1 // pred_fallthru
      _
    // Predicated region
    $region62: #{tpu_custom_call.1} parent=1 // pred_check
      _
    $region63: #{tpu_custom_call.1} parent=1 // pred_check_branch
      %87 = sbr.rel (0) target = $region65
    $region64: #{tpu_custom_call.1} parent=1 // pred_region
      _
    $region65: #{tpu_custom_call.1} parent=1 // pred_fallthru
      _
    // Predicated region
    $region66: #{tpu_custom_call.1} parent=1 // pred_check
      _
    $region67: #{tpu_custom_call.1} parent=1 // pred_check_branch
      %89 = sbr.rel (0) target = $region69
    $region68: #{tpu_custom_call.1} parent=1 // pred_region
      _
    $region69: #{tpu_custom_call.1} parent=1 // pred_fallthru
      _
    // Predicated region
    $region70: #{tpu_custom_call.1} parent=1 // pred_check
      _
    $region71: #{tpu_custom_call.1} parent=1 // pred_check_branch
      %91 = sbr.rel (0) target = $region73
    $region72: #{tpu_custom_call.1} parent=1 // pred_region
      _
    $region73: #{tpu_custom_call.1} parent=1 // pred_fallthru
      _
    // Predicated region
    $region74: #{tpu_custom_call.1} parent=1 // pred_check
      _
    $region75: #{tpu_custom_call.1} parent=1 // pred_check_branch
      %93 = sbr.rel (0) target = $region77
    $region76: #{tpu_custom_call.1} parent=1 // pred_region
      _
    $region77: #{tpu_custom_call.1} parent=1 // pred_fallthru
      _
    // Predicated region
    $region78: #{tpu_custom_call.1} parent=1 // pred_check
      _
    $region79: #{tpu_custom_call.1} parent=1 // pred_check_branch
      %95 = sbr.rel (0) target = $region81
    $region80: #{tpu_custom_call.1} parent=1 // pred_region
      _
    $region81: #{tpu_custom_call.1} parent=1 // pred_fallthru
      _
    // Predicated region
    $region82: #{tpu_custom_call.1} parent=1 // pred_check
      _
    $region83: #{tpu_custom_call.1} parent=1 // pred_check_branch
      %97 = sbr.rel (0) target = $region85
    $region84: #{tpu_custom_call.1} parent=1 // pred_region
      %98 = dma.done [#allocation3], 256
    $region85: #{tpu_custom_call.1} parent=1 // pred_fallthru
      _
    // Predicated region
    $region86: #{tpu_custom_call.1} parent=1 // pred_check
      _
    $region87: #{tpu_custom_call.1} parent=1 // pred_check_branch
      %100 = sbr.rel (0) target = $region89
    $region88: #{tpu_custom_call.1} parent=1 // pred_region
      %101 = dma.done [#allocation6], 64
    $region89: #{tpu_custom_call.1} parent=1 // pred_fallthru
      _
    // Predicated region
    $region90: #{tpu_custom_call.1} parent=1 // pred_check
      _
    $region91: #{tpu_custom_call.1} parent=1 // pred_check_branch
      %103 = sbr.rel (0) target = $region93
    $region92: #{tpu_custom_call.1} parent=1 // pred_region
      %104 = dma.done [#allocation6], 16
    $region93: #{tpu_custom_call.1} parent=1 // pred_fallthru
      _
    %v105 = vld [vmem:[#allocation2] sm:$0xff]
    %v106 = vld [vmem:[#allocation2 + $0x8] sm:$0xff]
    %v107 = vld [vmem:[#allocation5] sm:$0x1]
    %v108 = vld [vmem:[#allocation5 + $0x1] sm:$0x1]
    %v109 = vld [vmem:[#allocation5 + $0x2] sm:$0x1]
    %v110 = vld [vmem:[%s1] sm:$0xff]
    %v111 = vld [vmem:[%s1 + $0x8] sm:$0xff]
    %v112 = vld [vmem:[%s1 + $0x10] sm:$0xff]
    %v113 = vld [vmem:[%s1 + $0x18] sm:$0xff]
    %v114 = vlaneseq
    %v115 = vshrl.u32 %v114, 7
    %v116 = vsub.s32 0, %v115
    %v117 = vrot.slane %v107, %v116
    %vm118 = vcmask 261120
    %v120 = vsel %vm118, %v105, 0
    %v123 = vsel %vm118, %v106, 0
    %125 = vmatprep.subr.mxu0 0.0
    %126 = vmatpush1.msra.mxu0 %v110
    %127 = vmatprep.subr.mxu0 0.0
    %128 = vmatpush1.msra.mxu0 %v111
    %129 = vmatprep.subr.mxu0 0.0
    %130 = vmatpush1.msra.mxu0 %v112
    %131 = vmatprep.subr.mxu0 0.0
    %132 = vmatpush1.msra.mxu0 %v113
    %133 = vmatprep.subr.mxu0 0.0
    %134 = vmatpush1.msra.mxu0 0.0
    %135 = vmatprep.subr.mxu0 0.0
    %136 = vmatpush1.msra.mxu0 0.0
    %137 = vmatprep.subr.mxu0 0.0
    %138 = vmatpush1.msra.mxu0 0.0
    %139 = vmatprep.subr.mxu0 0.0
    %140 = vmatpush1.msra.mxu0 0.0
    %141 = vmatprep.subr.mxu0 0.0
    %142 = vmatpush1.msra.mxu0 0.0
    %143 = vmatprep.subr.mxu0 0.0
    %144 = vmatpush1.msra.mxu0 0.0
    %145 = vmatprep.subr.mxu0 0.0
    %146 = vmatpush1.msra.mxu0 0.0
    %147 = vmatprep.subr.mxu0 0.0
    %148 = vmatpush1.msra.mxu0 0.0
    %149 = vmatprep.subr.mxu0 0.0
    %150 = vmatpush1.msra.mxu0 0.0
    %151 = vmatprep.subr.mxu0 0.0
    %152 = vmatpush1.msra.mxu0 0.0
    %153 = vmatprep.subr.mxu0 0.0
    %154 = vmatpush1.msra.mxu0 0.0
    %155 = vmatprep.subr.mxu0 0.0
    %156 = vmatpush1.msra.mxu0 0.0
    %157 = vmatprep.subr.mxu0 0.0
    %158 = vmatpush1.msra.mxu0 0.0
    %159 = vmatprep.subr.mxu0 0.0
    %160 = vmatpush1.msra.mxu0 0.0
    %161 = vmatprep.subr.mxu0 0.0
    %162 = vmatpush1.msra.mxu0 0.0
    %163 = vmatprep.subr.mxu0 0.0
    %164 = vmatpush1.msra.mxu0 0.0
    %165 = vmatprep.subr.mxu0 0.0
    %166 = vmatpush1.msra.mxu0 0.0
    %167 = vmatprep.subr.mxu0 0.0
    %168 = vmatpush1.msra.mxu0 0.0
    %169 = vmatprep.subr.mxu0 0.0
    %170 = vmatpush1.msra.mxu0 0.0
    %171 = vmatprep.subr.mxu0 0.0
    %172 = vmatpush1.msra.mxu0 0.0
    %173 = vmatprep.subr.mxu0 0.0
    %174 = vmatpush1.msra.mxu0 0.0
    %175 = vmatprep.subr.mxu0 0.0
    %176 = vmatpush1.msra.mxu0 0.0
    %177 = vmatprep.subr.mxu0 0.0
    %178 = vmatpush1.msra.mxu0 0.0
    %179 = vmatprep.subr.mxu0 0.0
    %180 = vmatpush1.msra.mxu0 0.0
    %181 = vmatprep.subr.mxu0 0.0
    %182 = vmatpush1.msra.mxu0 0.0
    %183 = vmatprep.subr.mxu0 0.0
    %184 = vmatpush1.msra.mxu0 0.0
    %185 = vmatprep.subr.mxu0 0.0
    %186 = vmatpush1.msra.mxu0 0.0
    %187 = vmatprep.subr.mxu0 0.0
    %188 = vmatpush1.msra.mxu0 0.0
    %189 = vmatprep.mubr.f32.mxu0 0.0
    %190 = vmatmul.mubr.f32.gmra.mrb[0].mxu0 %v120
    %v191 = vpop.f32.mrb[0].mxu0
    %v192 = vadd.f32 %v117, %v191
    %v193 = vpop.f32.mrb[0].mxu0
    %194 = vmatprep.mubr.f32.mxu0 0.0
    %195 = vmatmul.mubr.f32.gmra.mrb[0].mxu0 %v123
    %v196 = vpop.f32.mrb[0].mxu0
    %v197 = vadd.f32 %v117, %v196
    %v198 = vpop.f32.mrb[0].mxu0
    %199 = vdwg.mxu0
    %v200 = vsel %vm118, %v192, 0.0
    %201 = vadd.xlane.f32.xlu0 %v200
    %v202 = vpop.xlane.xlu0 %201
    %v203 = vsel %vm118, %v197, 0.0
    %204 = vadd.xlane.f32.xlu0 %v203
    %v205 = vpop.xlane.xlu0 %204
    %v206 = vrcp.pop 32.0
    %v207 = vmul.f32 %v202, %v206
    %v208 = vmul.f32 %v205, %v206
    %v209 = vsub.f32 %v192, %v207
    %v210 = vsub.f32 %v197, %v208
    %v211 = vmul.f32 %v209, %v209
    %v212 = vmul.f32 %v210, %v210
    %v213 = vsel %vm118, %v211, 0.0
    %214 = vadd.xlane.f32.xlu0 %v213
    %v215 = vpop.xlane.xlu0 %214
    %v216 = vsel %vm118, %v212, 0.0
    %217 = vadd.xlane.f32.xlu0 %v216
    %v218 = vpop.xlane.xlu0 %217
    %v219 = vmul.f32 %v215, %v206
    %v220 = vmul.f32 %v218, %v206
    %v221 = vadd.f32 %v219, 1e-05
    %v222 = vadd.f32 %v220, 1e-05
    %v223 = vrsqrt.pop %v221
    %v224 = vrsqrt.pop %v222
    %v225 = vmul.f32 %v209, %v223
    %v226 = vmul.f32 %v210, %v224
    %v227 = vlaneseq
    %v228 = vshrl.u32 %v227, 7
    %v229 = vsub.s32 0, %v228
    %v230 = vrot.slane %v108, %v229
    %v231 = vmul.f32 %v225, %v230
    %v232 = vmul.f32 %v226, %v230
    %v233 = vlaneseq
    %v234 = vshrl.u32 %v233, 7
    %v235 = vsub.s32 0, %v234
    %v236 = vrot.slane %v109, %v235
    %v237 = vadd.f32 %v231, %v236
    %v238 = vadd.f32 %v232, %v236
    %v239 = vmax.f32 %v237, 0.0
    %v240 = vmax.f32 %v238, 0.0
    %v241 = vld [vmem:[%s3] sm:$0xff]
    %v242 = vld [vmem:[%s3 + $0x8] sm:$0xff]
    %v243 = vld [vmem:[%s3 + $0x10] sm:$0xff]
    %v244 = vld [vmem:[%s3 + $0x18] sm:$0xff]
    %v245 = vld [vmem:[%s4] sm:$0xff]
    %v246 = vld [vmem:[%s4 + $0x8] sm:$0xff]
    %v247 = vld [vmem:[%s4 + $0x10] sm:$0xff]
    %v248 = vld [vmem:[%s4 + $0x18] sm:$0xff]
    %249 = vmatprep.subr.mxu0 0.0
    %250 = vmatpush1.msra.mxu0 %v245
    %251 = vmatprep.subr.mxu0 0.0
    %252 = vmatpush1.msra.mxu0 %v246
    %253 = vmatprep.subr.mxu0 0.0
    %254 = vmatpush1.msra.mxu0 %v247
    %255 = vmatprep.subr.mxu0 0.0
    %256 = vmatpush1.msra.mxu0 %v248
    %257 = vmatprep.subr.mxu0 0.0
    %258 = vmatpush1.msra.mxu0 0.0
    %259 = vmatprep.subr.mxu0 0.0
    %260 = vmatpush1.msra.mxu0 0.0
    %261 = vmatprep.subr.mxu0 0.0
    %262 = vmatpush1.msra.mxu0 0.0
    %263 = vmatprep.subr.mxu0 0.0
    %264 = vmatpush1.msra.mxu0 0.0
    %265 = vmatprep.subr.mxu0 0.0
    %266 = vmatpush1.msra.mxu0 0.0
    %267 = vmatprep.subr.mxu0 0.0
    %268 = vmatpush1.msra.mxu0 0.0
    %269 = vmatprep.subr.mxu0 0.0
    %270 = vmatpush1.msra.mxu0 0.0
    %271 = vmatprep.subr.mxu0 0.0
    %272 = vmatpush1.msra.mxu0 0.0
    %273 = vmatprep.subr.mxu0 0.0
    %274 = vmatpush1.msra.mxu0 0.0
    %275 = vmatprep.subr.mxu0 0.0
    %276 = vmatpush1.msra.mxu0 0.0
    %277 = vmatprep.subr.mxu0 0.0
    %278 = vmatpush1.msra.mxu0 0.0
    %279 = vmatprep.subr.mxu0 0.0
    %280 = vmatpush1.msra.mxu0 0.0
    %281 = vmatprep.subr.mxu0 0.0
    %282 = vmatpush1.msra.mxu0 0.0
    %283 = vmatprep.subr.mxu0 0.0
    %284 = vmatpush1.msra.mxu0 0.0
    %285 = vmatprep.subr.mxu0 0.0
    %286 = vmatpush1.msra.mxu0 0.0
    %287 = vmatprep.subr.mxu0 0.0
    %288 = vmatpush1.msra.mxu0 0.0
    %289 = vmatprep.subr.mxu0 0.0
    %290 = vmatpush1.msra.mxu0 0.0
    %291 = vmatprep.subr.mxu0 0.0
    %292 = vmatpush1.msra.mxu0 0.0
    %293 = vmatprep.subr.mxu0 0.0
    %294 = vmatpush1.msra.mxu0 0.0
    %295 = vmatprep.subr.mxu0 0.0
    %296 = vmatpush1.msra.mxu0 0.0
    %297 = vmatprep.subr.mxu0 0.0
    %298 = vmatpush1.msra.mxu0 0.0
    %299 = vmatprep.subr.mxu0 0.0
    %300 = vmatpush1.msra.mxu0 0.0
    %301 = vmatprep.subr.mxu0 0.0
    %302 = vmatpush1.msra.mxu0 0.0
    %303 = vmatprep.subr.mxu0 0.0
    %304 = vmatpush1.msra.mxu0 0.0
    %305 = vmatprep.subr.mxu0 0.0
    %306 = vmatpush1.msra.mxu0 0.0
    %307 = vmatprep.subr.mxu0 0.0
    %308 = vmatpush1.msra.mxu0 0.0
    %309 = vmatprep.subr.mxu0 0.0
    %310 = vmatpush1.msra.mxu0 0.0
    %311 = vmatprep.subr.mxu0 0.0
    %312 = vmatpush1.msra.mxu0 0.0
    %313 = vmatprep.mubr.f32.mxu0 0.0
    %314 = vmatmul.mubr.f32.gmra.mrb[0].mxu0 %v120
    %v315 = vpop.f32.mrb[0].mxu0
    %v316 = vadd.f32 0.0, %v315
    %v317 = vpop.f32.mrb[0].mxu0
    %318 = vmatprep.mubr.f32.mxu0 0.0
    %319 = vmatmul.mubr.f32.gmra.mrb[0].mxu0 %v123
    %v320 = vpop.f32.mrb[0].mxu0
    %v321 = vadd.f32 0.0, %v320
    %v322 = vpop.f32.mrb[0].mxu0
    %323 = vdwg.mxu0
    %v325 = vsel %vm118, %v239, 0
    %v328 = vsel %vm118, %v240, 0
    %330 = vmatprep.subr.mxu0 0.0
    %331 = vmatpush1.msra.mxu0 %v241
    %332 = vmatprep.subr.mxu0 0.0
    %333 = vmatpush1.msra.mxu0 %v242
    %334 = vmatprep.subr.mxu0 0.0
    %335 = vmatpush1.msra.mxu0 %v243
    %336 = vmatprep.subr.mxu0 0.0
    %337 = vmatpush1.msra.mxu0 %v244
    %338 = vmatprep.subr.mxu0 0.0
    %339 = vmatpush1.msra.mxu0 0.0
    %340 = vmatprep.subr.mxu0 0.0
    %341 = vmatpush1.msra.mxu0 0.0
    %342 = vmatprep.subr.mxu0 0.0
    %343 = vmatpush1.msra.mxu0 0.0
    %344 = vmatprep.subr.mxu0 0.0
    %345 = vmatpush1.msra.mxu0 0.0
    %346 = vmatprep.subr.mxu0 0.0
    %347 = vmatpush1.msra.mxu0 0.0
    %348 = vmatprep.subr.mxu0 0.0
    %349 = vmatpush1.msra.mxu0 0.0
    %350 = vmatprep.subr.mxu0 0.0
    %351 = vmatpush1.msra.mxu0 0.0
    %352 = vmatprep.subr.mxu0 0.0
    %353 = vmatpush1.msra.mxu0 0.0
    %354 = vmatprep.subr.mxu0 0.0
    %355 = vmatpush1.msra.mxu0 0.0
    %356 = vmatprep.subr.mxu0 0.0
    %357 = vmatpush1.msra.mxu0 0.0
    %358 = vmatprep.subr.mxu0 0.0
    %359 = vmatpush1.msra.mxu0 0.0
    %360 = vmatprep.subr.mxu0 0.0
    %361 = vmatpush1.msra.mxu0 0.0
    %362 = vmatprep.subr.mxu0 0.0
    %363 = vmatpush1.msra.mxu0 0.0
    %364 = vmatprep.subr.mxu0 0.0
    %365 = vmatpush1.msra.mxu0 0.0
    %366 = vmatprep.subr.mxu0 0.0
    %367 = vmatpush1.msra.mxu0 0.0
    %368 = vmatprep.subr.mxu0 0.0
    %369 = vmatpush1.msra.mxu0 0.0
    %370 = vmatprep.subr.mxu0 0.0
    %371 = vmatpush1.msra.mxu0 0.0
    %372 = vmatprep.subr.mxu0 0.0
    %373 = vmatpush1.msra.mxu0 0.0
    %374 = vmatprep.subr.mxu0 0.0
    %375 = vmatpush1.msra.mxu0 0.0
    %376 = vmatprep.subr.mxu0 0.0
    %377 = vmatpush1.msra.mxu0 0.0
    %378 = vmatprep.subr.mxu0 0.0
    %379 = vmatpush1.msra.mxu0 0.0
    %380 = vmatprep.subr.mxu0 0.0
    %381 = vmatpush1.msra.mxu0 0.0
    %382 = vmatprep.subr.mxu0 0.0
    %383 = vmatpush1.msra.mxu0 0.0
    %384 = vmatprep.subr.mxu0 0.0
    %385 = vmatpush1.msra.mxu0 0.0
    %386 = vmatprep.subr.mxu0 0.0
    %387 = vmatpush1.msra.mxu0 0.0
    %388 = vmatprep.subr.mxu0 0.0
    %389 = vmatpush1.msra.mxu0 0.0
    %390 = vmatprep.subr.mxu0 0.0
    %391 = vmatpush1.msra.mxu0 0.0
    %392 = vmatprep.subr.mxu0 0.0
    %393 = vmatpush1.msra.mxu0 0.0
    %394 = vmatprep.mubr.f32.mxu0 0.0
    %395 = vmatmul.mubr.f32.gmra.mrb[0].mxu0 %v325
    %v396 = vpop.f32.mrb[0].mxu0
    %v397 = vadd.f32 %v316, %v396
    %v398 = vpop.f32.mrb[0].mxu0
    %399 = vmatprep.mubr.f32.mxu0 0.0
    %400 = vmatmul.mubr.f32.gmra.mrb[0].mxu0 %v328
    %v401 = vpop.f32.mrb[0].mxu0
    %v402 = vadd.f32 %v321, %v401
    %v403 = vpop.f32.mrb[0].mxu0
    %404 = vdwg.mxu0
    %v405 = vld [vmem:[#allocation7] sm:$0x1]
    %v407 = vlaneseq
    %v408 = vshrl.u32 %v407, 7
    %v409 = vsub.s32 0, %v408
    %v410 = vrot.slane %v405, %v409
    %v412 = vadd.f32 %v397, %v410
    %v413 = vadd.f32 %v402, %v410
    %v414 = vld [vmem:[%s8] sm:$0x1]
    %v415 = vld [vmem:[%s8 + $0x1] sm:$0x1]
    %v416 = vld [vmem:[%s8 + $0x2] sm:$0x1]
    %v417 = vld [vmem:[%s15] sm:$0x1]
    %v418 = vld [vmem:[%s15 + $0x1] sm:$0x1]
    %v419 = vld [vmem:[%s15 + $0x2] sm:$0x1]
    %v420 = vld [vmem:[%s6] sm:$0xff]
    %v421 = vld [vmem:[%s6 + $0x8] sm:$0xff]
    %v422 = vld [vmem:[%s6 + $0x10] sm:$0xff]
    %v423 = vld [vmem:[%s6 + $0x18] sm:$0xff]
    %v424 = vlaneseq
    %v425 = vshrl.u32 %v424, 7
    %v426 = vsub.s32 0, %v425
    %v427 = vrot.slane %v414, %v426
    %428 = vmatprep.subr.mxu0 0.0
    %429 = vmatpush1.msra.mxu0 %v420
    %430 = vmatprep.subr.mxu0 0.0
    %431 = vmatpush1.msra.mxu0 %v421
    %432 = vmatprep.subr.mxu0 0.0
    %433 = vmatpush1.msra.mxu0 %v422
    %434 = vmatprep.subr.mxu0 0.0
    %435 = vmatpush1.msra.mxu0 %v423
    %436 = vmatprep.subr.mxu0 0.0
    %437 = vmatpush1.msra.mxu0 0.0
    %438 = vmatprep.subr.mxu0 0.0
    %439 = vmatpush1.msra.mxu0 0.0
    %440 = vmatprep.subr.mxu0 0.0
    %441 = vmatpush1.msra.mxu0 0.0
    %442 = vmatprep.subr.mxu0 0.0
    %443 = vmatpush1.msra.mxu0 0.0
    %444 = vmatprep.subr.mxu0 0.0
    %445 = vmatpush1.msra.mxu0 0.0
    %446 = vmatprep.subr.mxu0 0.0
    %447 = vmatpush1.msra.mxu0 0.0
    %448 = vmatprep.subr.mxu0 0.0
    %449 = vmatpush1.msra.mxu0 0.0
    %450 = vmatprep.subr.mxu0 0.0
    %451 = vmatpush1.msra.mxu0 0.0
    %452 = vmatprep.subr.mxu0 0.0
    %453 = vmatpush1.msra.mxu0 0.0
    %454 = vmatprep.subr.mxu0 0.0
    %455 = vmatpush1.msra.mxu0 0.0
    %456 = vmatprep.subr.mxu0 0.0
    %457 = vmatpush1.msra.mxu0 0.0
    %458 = vmatprep.subr.mxu0 0.0
    %459 = vmatpush1.msra.mxu0 0.0
    %460 = vmatprep.subr.mxu0 0.0
    %461 = vmatpush1.msra.mxu0 0.0
    %462 = vmatprep.subr.mxu0 0.0
    %463 = vmatpush1.msra.mxu0 0.0
    %464 = vmatprep.subr.mxu0 0.0
    %465 = vmatpush1.msra.mxu0 0.0
    %466 = vmatprep.subr.mxu0 0.0
    %467 = vmatpush1.msra.mxu0 0.0
    %468 = vmatprep.subr.mxu0 0.0
    %469 = vmatpush1.msra.mxu0 0.0
    %470 = vmatprep.subr.mxu0 0.0
    %471 = vmatpush1.msra.mxu0 0.0
    %472 = vmatprep.subr.mxu0 0.0
    %473 = vmatpush1.msra.mxu0 0.0
    %474 = vmatprep.subr.mxu0 0.0
    %475 = vmatpush1.msra.mxu0 0.0
    %476 = vmatprep.subr.mxu0 0.0
    %477 = vmatpush1.msra.mxu0 0.0
    %478 = vmatprep.subr.mxu0 0.0
    %479 = vmatpush1.msra.mxu0 0.0
    %480 = vmatprep.subr.mxu0 0.0
    %481 = vmatpush1.msra.mxu0 0.0
    %482 = vmatprep.subr.mxu0 0.0
    %483 = vmatpush1.msra.mxu0 0.0
    %484 = vmatprep.subr.mxu0 0.0
    %485 = vmatpush1.msra.mxu0 0.0
    %486 = vmatprep.subr.mxu0 0.0
    %487 = vmatpush1.msra.mxu0 0.0
    %488 = vmatprep.subr.mxu0 0.0
    %489 = vmatpush1.msra.mxu0 0.0
    %490 = vmatprep.subr.mxu0 0.0
    %491 = vmatpush1.msra.mxu0 0.0
    %492 = vmatprep.mubr.f32.mxu0 0.0
    %493 = vmatmul.mubr.f32.gmra.mrb[0].mxu0 %v120
    %v494 = vpop.f32.mrb[0].mxu0
    %v495 = vadd.f32 %v427, %v494
    %v496 = vpop.f32.mrb[0].mxu0
    %497 = vmatprep.mubr.f32.mxu0 0.0
    %498 = vmatmul.mubr.f32.gmra.mrb[0].mxu0 %v123
    %v499 = vpop.f32.mrb[0].mxu0
    %v500 = vadd.f32 %v427, %v499
    %v501 = vpop.f32.mrb[0].mxu0
    %502 = vdwg.mxu0
    %v503 = vld [vmem:[%s10] sm:$0xff]
    %v504 = vld [vmem:[%s10 + $0x8] sm:$0xff]
    %v505 = vld [vmem:[%s10 + $0x10] sm:$0xff]
    %v506 = vld [vmem:[%s10 + $0x18] sm:$0xff]
    %v507 = vld [vmem:[%s12] sm:$0x1]
    %v509 = vlaneseq
    %v510 = vshrl.u32 %v509, 7
    %v511 = vsub.s32 0, %v510
    %v512 = vrot.slane %v507, %v511
    %514 = vmatprep.subr.mxu0 0.0
    %515 = vmatpush1.msra.mxu0 %v503
    %516 = vmatprep.subr.mxu0 0.0
    %517 = vmatpush1.msra.mxu0 %v504
    %518 = vmatprep.subr.mxu0 0.0
    %519 = vmatpush1.msra.mxu0 %v505
    %520 = vmatprep.subr.mxu0 0.0
    %521 = vmatpush1.msra.mxu0 %v506
    %522 = vmatprep.subr.mxu0 0.0
    %523 = vmatpush1.msra.mxu0 0.0
    %524 = vmatprep.subr.mxu0 0.0
    %525 = vmatpush1.msra.mxu0 0.0
    %526 = vmatprep.subr.mxu0 0.0
    %527 = vmatpush1.msra.mxu0 0.0
    %528 = vmatprep.subr.mxu0 0.0
    %529 = vmatpush1.msra.mxu0 0.0
    %530 = vmatprep.subr.mxu0 0.0
    %531 = vmatpush1.msra.mxu0 0.0
    %532 = vmatprep.subr.mxu0 0.0
    %533 = vmatpush1.msra.mxu0 0.0
    %534 = vmatprep.subr.mxu0 0.0
    %535 = vmatpush1.msra.mxu0 0.0
    %536 = vmatprep.subr.mxu0 0.0
    %537 = vmatpush1.msra.mxu0 0.0
    %538 = vmatprep.subr.mxu0 0.0
    %539 = vmatpush1.msra.mxu0 0.0
    %540 = vmatprep.subr.mxu0 0.0
    %541 = vmatpush1.msra.mxu0 0.0
    %542 = vmatprep.subr.mxu0 0.0
    %543 = vmatpush1.msra.mxu0 0.0
    %544 = vmatprep.subr.mxu0 0.0
    %545 = vmatpush1.msra.mxu0 0.0
    %546 = vmatprep.subr.mxu0 0.0
    %547 = vmatpush1.msra.mxu0 0.0
    %548 = vmatprep.subr.mxu0 0.0
    %549 = vmatpush1.msra.mxu0 0.0
    %550 = vmatprep.subr.mxu0 0.0
    %551 = vmatpush1.msra.mxu0 0.0
    %552 = vmatprep.subr.mxu0 0.0
    %553 = vmatpush1.msra.mxu0 0.0
    %554 = vmatprep.subr.mxu0 0.0
    %555 = vmatpush1.msra.mxu0 0.0
    %556 = vmatprep.subr.mxu0 0.0
    %557 = vmatpush1.msra.mxu0 0.0
    %558 = vmatprep.subr.mxu0 0.0
    %559 = vmatpush1.msra.mxu0 0.0
    %560 = vmatprep.subr.mxu0 0.0
    %561 = vmatpush1.msra.mxu0 0.0
    %562 = vmatprep.subr.mxu0 0.0
    %563 = vmatpush1.msra.mxu0 0.0
    %564 = vmatprep.subr.mxu0 0.0
    %565 = vmatpush1.msra.mxu0 0.0
    %566 = vmatprep.subr.mxu0 0.0
    %567 = vmatpush1.msra.mxu0 0.0
    %568 = vmatprep.subr.mxu0 0.0
    %569 = vmatpush1.msra.mxu0 0.0
    %570 = vmatprep.subr.mxu0 0.0
    %571 = vmatpush1.msra.mxu0 0.0
    %572 = vmatprep.subr.mxu0 0.0
    %573 = vmatpush1.msra.mxu0 0.0
    %574 = vmatprep.subr.mxu0 0.0
    %575 = vmatpush1.msra.mxu0 0.0
    %576 = vmatprep.subr.mxu0 0.0
    %577 = vmatpush1.msra.mxu0 0.0
    %578 = vmatprep.mubr.f32.mxu0 0.0
    %579 = vmatmul.mubr.f32.gmra.mrb[0].mxu0 %v120
    %v580 = vpop.f32.mrb[0].mxu0
    %v581 = vadd.f32 %v512, %v580
    %v582 = vpop.f32.mrb[0].mxu0
    %583 = vmatprep.mubr.f32.mxu0 0.0
    %584 = vmatmul.mubr.f32.gmra.mrb[0].mxu0 %v123
    %v585 = vpop.f32.mrb[0].mxu0
    %v586 = vadd.f32 %v512, %v585
    %v587 = vpop.f32.mrb[0].mxu0
    %588 = vdwg.mxu0
    %v589 = vld [vmem:[%s13] sm:$0xff]
    %v590 = vld [vmem:[%s13 + $0x8] sm:$0xff]
    %v591 = vld [vmem:[%s13 + $0x10] sm:$0xff]
    %v592 = vld [vmem:[%s13 + $0x18] sm:$0xff]
    %v593 = vlaneseq
    %v594 = vshrl.u32 %v593, 7
    %v595 = vsub.s32 0, %v594
    %v596 = vrot.slane %v417, %v595
    %597 = vmatprep.subr.mxu0 0.0
    %598 = vmatpush1.msra.mxu0 %v589
    %599 = vmatprep.subr.mxu0 0.0
    %600 = vmatpush1.msra.mxu0 %v590
    %601 = vmatprep.subr.mxu0 0.0
    %602 = vmatpush1.msra.mxu0 %v591
    %603 = vmatprep.subr.mxu0 0.0
    %604 = vmatpush1.msra.mxu0 %v592
    %605 = vmatprep.subr.mxu0 0.0
    %606 = vmatpush1.msra.mxu0 0.0
    %607 = vmatprep.subr.mxu0 0.0
    %608 = vmatpush1.msra.mxu0 0.0
    %609 = vmatprep.subr.mxu0 0.0
    %610 = vmatpush1.msra.mxu0 0.0
    %611 = vmatprep.subr.mxu0 0.0
    %612 = vmatpush1.msra.mxu0 0.0
    %613 = vmatprep.subr.mxu0 0.0
    %614 = vmatpush1.msra.mxu0 0.0
    %615 = vmatprep.subr.mxu0 0.0
    %616 = vmatpush1.msra.mxu0 0.0
    %617 = vmatprep.subr.mxu0 0.0
    %618 = vmatpush1.msra.mxu0 0.0
    %619 = vmatprep.subr.mxu0 0.0
    %620 = vmatpush1.msra.mxu0 0.0
    %621 = vmatprep.subr.mxu0 0.0
    %622 = vmatpush1.msra.mxu0 0.0
    %623 = vmatprep.subr.mxu0 0.0
    %624 = vmatpush1.msra.mxu0 0.0
    %625 = vmatprep.subr.mxu0 0.0
    %626 = vmatpush1.msra.mxu0 0.0
    %627 = vmatprep.subr.mxu0 0.0
    %628 = vmatpush1.msra.mxu0 0.0
    %629 = vmatprep.subr.mxu0 0.0
    %630 = vmatpush1.msra.mxu0 0.0
    %631 = vmatprep.subr.mxu0 0.0
    %632 = vmatpush1.msra.mxu0 0.0
    %633 = vmatprep.subr.mxu0 0.0
    %634 = vmatpush1.msra.mxu0 0.0
    %635 = vmatprep.subr.mxu0 0.0
    %636 = vmatpush1.msra.mxu0 0.0
    %637 = vmatprep.subr.mxu0 0.0
    %638 = vmatpush1.msra.mxu0 0.0
    %639 = vmatprep.subr.mxu0 0.0
    %640 = vmatpush1.msra.mxu0 0.0
    %641 = vmatprep.subr.mxu0 0.0
    %642 = vmatpush1.msra.mxu0 0.0
    %643 = vmatprep.subr.mxu0 0.0
    %644 = vmatpush1.msra.mxu0 0.0
    %645 = vmatprep.subr.mxu0 0.0
    %646 = vmatpush1.msra.mxu0 0.0
    %647 = vmatprep.subr.mxu0 0.0
    %648 = vmatpush1.msra.mxu0 0.0
    %649 = vmatprep.subr.mxu0 0.0
    %650 = vmatpush1.msra.mxu0 0.0
    %651 = vmatprep.subr.mxu0 0.0
    %652 = vmatpush1.msra.mxu0 0.0
    %653 = vmatprep.subr.mxu0 0.0
    %654 = vmatpush1.msra.mxu0 0.0
    %655 = vmatprep.subr.mxu0 0.0
    %656 = vmatpush1.msra.mxu0 0.0
    %657 = vmatprep.subr.mxu0 0.0
    %658 = vmatpush1.msra.mxu0 0.0
    %659 = vmatprep.subr.mxu0 0.0
    %660 = vmatpush1.msra.mxu0 0.0
    %661 = vmatprep.mubr.f32.mxu0 0.0
    %662 = vmatmul.mubr.f32.gmra.mrb[0].mxu0 %v120
    %v663 = vpop.f32.mrb[0].mxu0
    %v664 = vadd.f32 %v596, %v663
    %v665 = vpop.f32.mrb[0].mxu0
    %666 = vmatprep.mubr.f32.mxu0 0.0
    %667 = vmatmul.mubr.f32.gmra.mrb[0].mxu0 %v123
    %v668 = vpop.f32.mrb[0].mxu0
    %v669 = vadd.f32 %v596, %v668
    %v670 = vpop.f32.mrb[0].mxu0
    %671 = vdwg.mxu0
    %v672 = vld [vmem:[%s17] sm:$0xff]
    %v673 = vld [vmem:[%s17 + $0x8] sm:$0xff]
    %v674 = vld [vmem:[%s17 + $0x10] sm:$0xff]
    %v675 = vld [vmem:[%s17 + $0x18] sm:$0xff]
    %v676 = vld [vmem:[%s19] sm:$0x1]
    %v678 = vlaneseq
    %v679 = vshrl.u32 %v678, 7
    %v680 = vsub.s32 0, %v679
    %v681 = vrot.slane %v676, %v680
    %683 = vmatprep.subr.mxu0 0.0
    %684 = vmatpush1.msra.mxu0 %v672
    %685 = vmatprep.subr.mxu0 0.0
    %686 = vmatpush1.msra.mxu0 %v673
    %687 = vmatprep.subr.mxu0 0.0
    %688 = vmatpush1.msra.mxu0 %v674
    %689 = vmatprep.subr.mxu0 0.0
    %690 = vmatpush1.msra.mxu0 %v675
    %691 = vmatprep.subr.mxu0 0.0
    %692 = vmatpush1.msra.mxu0 0.0
    %693 = vmatprep.subr.mxu0 0.0
    %694 = vmatpush1.msra.mxu0 0.0
    %695 = vmatprep.subr.mxu0 0.0
    %696 = vmatpush1.msra.mxu0 0.0
    %697 = vmatprep.subr.mxu0 0.0
    %698 = vmatpush1.msra.mxu0 0.0
    %699 = vmatprep.subr.mxu0 0.0
    %700 = vmatpush1.msra.mxu0 0.0
    %701 = vmatprep.subr.mxu0 0.0
    %702 = vmatpush1.msra.mxu0 0.0
    %703 = vmatprep.subr.mxu0 0.0
    %704 = vmatpush1.msra.mxu0 0.0
    %705 = vmatprep.subr.mxu0 0.0
    %706 = vmatpush1.msra.mxu0 0.0
    %707 = vmatprep.subr.mxu0 0.0
    %708 = vmatpush1.msra.mxu0 0.0
    %709 = vmatprep.subr.mxu0 0.0
    %710 = vmatpush1.msra.mxu0 0.0
    %711 = vmatprep.subr.mxu0 0.0
    %712 = vmatpush1.msra.mxu0 0.0
    %713 = vmatprep.subr.mxu0 0.0
    %714 = vmatpush1.msra.mxu0 0.0
    %715 = vmatprep.subr.mxu0 0.0
    %716 = vmatpush1.msra.mxu0 0.0
    %717 = vmatprep.subr.mxu0 0.0
    %718 = vmatpush1.msra.mxu0 0.0
    %719 = vmatprep.subr.mxu0 0.0
    %720 = vmatpush1.msra.mxu0 0.0
    %721 = vmatprep.subr.mxu0 0.0
    %722 = vmatpush1.msra.mxu0 0.0
    %723 = vmatprep.subr.mxu0 0.0
    %724 = vmatpush1.msra.mxu0 0.0
    %725 = vmatprep.subr.mxu0 0.0
    %726 = vmatpush1.msra.mxu0 0.0
    %727 = vmatprep.subr.mxu0 0.0
    %728 = vmatpush1.msra.mxu0 0.0
    %729 = vmatprep.subr.mxu0 0.0
    %730 = vmatpush1.msra.mxu0 0.0
    %731 = vmatprep.subr.mxu0 0.0
    %732 = vmatpush1.msra.mxu0 0.0
    %733 = vmatprep.subr.mxu0 0.0
    %734 = vmatpush1.msra.mxu0 0.0
    %735 = vmatprep.subr.mxu0 0.0
    %736 = vmatpush1.msra.mxu0 0.0
    %737 = vmatprep.subr.mxu0 0.0
    %738 = vmatpush1.msra.mxu0 0.0
    %739 = vmatprep.subr.mxu0 0.0
    %740 = vmatpush1.msra.mxu0 0.0
    %741 = vmatprep.subr.mxu0 0.0
    %742 = vmatpush1.msra.mxu0 0.0
    %743 = vmatprep.subr.mxu0 0.0
    %744 = vmatpush1.msra.mxu0 0.0
    %745 = vmatprep.subr.mxu0 0.0
    %746 = vmatpush1.msra.mxu0 0.0
    %747 = vmatprep.mubr.f32.mxu0 0.0
    %748 = vmatmul.mubr.f32.gmra.mrb[0].mxu0 %v120
    %v749 = vpop.f32.mrb[0].mxu0
    %v750 = vadd.f32 %v681, %v749
    %v751 = vpop.f32.mrb[0].mxu0
    %752 = vmatprep.mubr.f32.mxu0 0.0
    %753 = vmatmul.mubr.f32.gmra.mrb[0].mxu0 %v123
    %v754 = vpop.f32.mrb[0].mxu0
    %v755 = vadd.f32 %v681, %v754
    %v756 = vpop.f32.mrb[0].mxu0
    %757 = vdwg.mxu0
    %760 = vrot.lane.b32.xlu0 %v412, 126
    %v761 = vpop.permute.xlu0 %760
    %762 = vrot.lane.b32.xlu0 %v413, 126
    %v763 = vpop.permute.xlu0 %762
    %766 = vrot.lane.b32.xlu0 %v412, 124
    %v767 = vpop.permute.xlu0 %766
    %768 = vrot.lane.b32.xlu0 %v413, 124
    %v769 = vpop.permute.xlu0 %768
    %772 = vrot.lane.b32.xlu0 %v412, 122
    %v773 = vpop.permute.xlu0 %772
    %774 = vrot.lane.b32.xlu0 %v413, 122
    %v775 = vpop.permute.xlu0 %774
    %778 = vrot.lane.b32.xlu0 %v412, 120
    %v779 = vpop.permute.xlu0 %778
    %780 = vrot.lane.b32.xlu0 %v413, 120
    %v781 = vpop.permute.xlu0 %780
    %784 = vrot.lane.b32.xlu0 %v412, 118
    %v785 = vpop.permute.xlu0 %784
    %786 = vrot.lane.b32.xlu0 %v413, 118
    %v787 = vpop.permute.xlu0 %786
    %v790 = vld [vmem:[%s7] sm:$0x1]
    %791 = vset.pattern.permute.xlu0 0
    %792 = vperm.xlu0 %791, %v412
    %v793 = vpop.permute.xlu0 %792
    %795 = vset.pattern.permute.xlu0 0
    %796 = vperm.xlu0 %795, %v413
    %v797 = vpop.permute.xlu0 %796
    %799 = vset.pattern.permute.xlu0 0
    %800 = vperm.xlu0 %799, %v761
    %v801 = vpop.permute.xlu0 %800
    %803 = vset.pattern.permute.xlu0 0
    %804 = vperm.xlu0 %803, %v763
    %v805 = vpop.permute.xlu0 %804
    %807 = vset.pattern.permute.xlu0 0
    %808 = vperm.xlu0 %807, %v767
    %v809 = vpop.permute.xlu0 %808
    %811 = vset.pattern.permute.xlu0 0
    %812 = vperm.xlu0 %811, %v769
    %v813 = vpop.permute.xlu0 %812
    %815 = vset.pattern.permute.xlu0 0
    %816 = vperm.xlu0 %815, %v773
    %v817 = vpop.permute.xlu0 %816
    %819 = vset.pattern.permute.xlu0 0
    %820 = vperm.xlu0 %819, %v775
    %v821 = vpop.permute.xlu0 %820
    %823 = vset.pattern.permute.xlu0 0
    %824 = vperm.xlu0 %823, %v779
    %v825 = vpop.permute.xlu0 %824
    %827 = vset.pattern.permute.xlu0 0
    %828 = vperm.xlu0 %827, %v781
    %v829 = vpop.permute.xlu0 %828
    %831 = vset.pattern.permute.xlu0 0
    %832 = vperm.xlu0 %831, %v785
    %v833 = vpop.permute.xlu0 %832
    %835 = vset.pattern.permute.xlu0 0
    %836 = vperm.xlu0 %835, %v787
    %v837 = vpop.permute.xlu0 %836
    %v839 = vlaneseq
    %v840 = vshrl.u32 %v839, 7
    %v841 = vsub.s32 0, %v840
    %v842 = vrot.slane %v790, %v841
    %v843 = vmul.f32 %v793, %v842
    %v844 = vmul.f32 %v797, %v842
    %v845 = vmul.f32 %v801, %v842
    %v846 = vmul.f32 %v805, %v842
    %v847 = vmul.f32 %v809, %v842
    %v848 = vmul.f32 %v813, %v842
    %v849 = vmul.f32 %v817, %v842
    %v850 = vmul.f32 %v821, %v842
    %v851 = vmul.f32 %v825, %v842
    %v852 = vmul.f32 %v829, %v842
    %v853 = vmul.f32 %v833, %v842
    %v854 = vmul.f32 %v837, %v842
    %v855 = vadd.f32 %v495, %v843
    %v856 = vadd.f32 %v500, %v844
    %v857 = vadd.f32 %v495, %v845
    %v858 = vadd.f32 %v500, %v846
    %v859 = vadd.f32 %v495, %v847
    %v860 = vadd.f32 %v500, %v848
    %v861 = vadd.f32 %v495, %v849
    %v862 = vadd.f32 %v500, %v850
    %v863 = vadd.f32 %v495, %v851
    %v864 = vadd.f32 %v500, %v852
    %v865 = vadd.f32 %v495, %v853
    %v866 = vadd.f32 %v500, %v854
    %v867 = vld [vmem:[%s7 + $0x1] sm:$0x1]
    %868 = vset.pattern.permute.xlu0 1
    %869 = vperm.xlu0 %868, %v412
    %v870 = vpop.permute.xlu0 %869
    %872 = vset.pattern.permute.xlu0 1
    %873 = vperm.xlu0 %872, %v413
    %v874 = vpop.permute.xlu0 %873
    %876 = vset.pattern.permute.xlu0 1
    %877 = vperm.xlu0 %876, %v761
    %v878 = vpop.permute.xlu0 %877
    %880 = vset.pattern.permute.xlu0 1
    %881 = vperm.xlu0 %880, %v763
    %v882 = vpop.permute.xlu0 %881
    %884 = vset.pattern.permute.xlu0 1
    %885 = vperm.xlu0 %884, %v767
    %v886 = vpop.permute.xlu0 %885
    %888 = vset.pattern.permute.xlu0 1
    %889 = vperm.xlu0 %888, %v769
    %v890 = vpop.permute.xlu0 %889
    %892 = vset.pattern.permute.xlu0 1
    %893 = vperm.xlu0 %892, %v773
    %v894 = vpop.permute.xlu0 %893
    %896 = vset.pattern.permute.xlu0 1
    %897 = vperm.xlu0 %896, %v775
    %v898 = vpop.permute.xlu0 %897
    %900 = vset.pattern.permute.xlu0 1
    %901 = vperm.xlu0 %900, %v779
    %v902 = vpop.permute.xlu0 %901
    %904 = vset.pattern.permute.xlu0 1
    %905 = vperm.xlu0 %904, %v781
    %v906 = vpop.permute.xlu0 %905
    %908 = vset.pattern.permute.xlu0 1
    %909 = vperm.xlu0 %908, %v785
    %v910 = vpop.permute.xlu0 %909
    %912 = vset.pattern.permute.xlu0 1
    %913 = vperm.xlu0 %912, %v787
    %v914 = vpop.permute.xlu0 %913
    %v916 = vlaneseq
    %v917 = vshrl.u32 %v916, 7
    %v918 = vsub.s32 0, %v917
    %v919 = vrot.slane %v867, %v918
    %v920 = vmul.f32 %v870, %v919
    %v921 = vmul.f32 %v874, %v919
    %v922 = vmul.f32 %v878, %v919
    %v923 = vmul.f32 %v882, %v919
    %v924 = vmul.f32 %v886, %v919
    %v925 = vmul.f32 %v890, %v919
    %v926 = vmul.f32 %v894, %v919
    %v927 = vmul.f32 %v898, %v919
    %v928 = vmul.f32 %v902, %v919
    %v929 = vmul.f32 %v906, %v919
    %v930 = vmul.f32 %v910, %v919
    %v931 = vmul.f32 %v914, %v919
    %v932 = vadd.f32 %v855, %v920
    %v933 = vadd.f32 %v856, %v921
    %v934 = vadd.f32 %v857, %v922
    %v935 = vadd.f32 %v858, %v923
    %v936 = vadd.f32 %v859, %v924
    %v937 = vadd.f32 %v860, %v925
    %v938 = vadd.f32 %v861, %v926
    %v939 = vadd.f32 %v862, %v927
    %v940 = vadd.f32 %v863, %v928
    %v941 = vadd.f32 %v864, %v929
    %v942 = vadd.f32 %v865, %v930
    %v943 = vadd.f32 %v866, %v931
    %vm944 = vcmask 277504
    %v945 = vsel %vm944, %v932, 0.0
    %946 = vadd.xlane.f32.xlu0 %v945
    %v947 = vpop.xlane.xlu0 %946
    %v948 = vsel %vm944, %v933, 0.0
    %949 = vadd.xlane.f32.xlu0 %v948
    %v950 = vpop.xlane.xlu0 %949
    %v951 = vsel %vm944, %v934, 0.0
    %952 = vadd.xlane.f32.xlu0 %v951
    %v953 = vpop.xlane.xlu0 %952
    %v954 = vsel %vm944, %v935, 0.0
    %955 = vadd.xlane.f32.xlu0 %v954
    %v956 = vpop.xlane.xlu0 %955
    %v957 = vsel %vm944, %v936, 0.0
    %958 = vadd.xlane.f32.xlu0 %v957
    %v959 = vpop.xlane.xlu0 %958
    %v960 = vsel %vm944, %v937, 0.0
    %961 = vadd.xlane.f32.xlu0 %v960
    %v962 = vpop.xlane.xlu0 %961
    %v963 = vsel %vm944, %v938, 0.0
    %964 = vadd.xlane.f32.xlu0 %v963
    %v965 = vpop.xlane.xlu0 %964
    %v966 = vsel %vm944, %v939, 0.0
    %967 = vadd.xlane.f32.xlu0 %v966
    %v968 = vpop.xlane.xlu0 %967
    %v969 = vsel %vm944, %v940, 0.0
    %970 = vadd.xlane.f32.xlu0 %v969
    %v971 = vpop.xlane.xlu0 %970
    %v972 = vsel %vm944, %v941, 0.0
    %973 = vadd.xlane.f32.xlu0 %v972
    %v974 = vpop.xlane.xlu0 %973
    %v975 = vsel %vm944, %v942, 0.0
    %976 = vadd.xlane.f32.xlu0 %v975
    %v977 = vpop.xlane.xlu0 %976
    %v978 = vsel %vm944, %v943, 0.0
    %979 = vadd.xlane.f32.xlu0 %v978
    %v980 = vpop.xlane.xlu0 %979
    %v981 = vrcp.pop 34.0
    %v982 = vmul.f32 %v947, %v981
    %v983 = vmul.f32 %v950, %v981
    %v984 = vmul.f32 %v953, %v981
    %v985 = vmul.f32 %v956, %v981
    %v986 = vmul.f32 %v959, %v981
    %v987 = vmul.f32 %v962, %v981
    %v988 = vmul.f32 %v965, %v981
    %v989 = vmul.f32 %v968, %v981
    %v990 = vmul.f32 %v971, %v981
    %v991 = vmul.f32 %v974, %v981
    %v992 = vmul.f32 %v977, %v981
    %v993 = vmul.f32 %v980, %v981
    %v994 = vsub.f32 %v932, %v982
    %v995 = vsub.f32 %v933, %v983
    %v996 = vsub.f32 %v934, %v984
    %v997 = vsub.f32 %v935, %v985
    %v998 = vsub.f32 %v936, %v986
    %v999 = vsub.f32 %v937, %v987
    %v1000 = vsub.f32 %v938, %v988
    %v1001 = vsub.f32 %v939, %v989
    %v1002 = vsub.f32 %v940, %v990
    %v1003 = vsub.f32 %v941, %v991
    %v1004 = vsub.f32 %v942, %v992
    %v1005 = vsub.f32 %v943, %v993
    %v1006 = vmul.f32 %v994, %v994
    %v1007 = vmul.f32 %v995, %v995
    %v1008 = vmul.f32 %v996, %v996
    %v1009 = vmul.f32 %v997, %v997
    %v1010 = vmul.f32 %v998, %v998
    %v1011 = vmul.f32 %v999, %v999
    %v1012 = vmul.f32 %v1000, %v1000
    %v1013 = vmul.f32 %v1001, %v1001
    %v1014 = vmul.f32 %v1002, %v1002
    %v1015 = vmul.f32 %v1003, %v1003
    %v1016 = vmul.f32 %v1004, %v1004
    %v1017 = vmul.f32 %v1005, %v1005
    %v1018 = vsel %vm944, %v1006, 0.0
    %1019 = vadd.xlane.f32.xlu0 %v1018
    %v1020 = vpop.xlane.xlu0 %1019
    %v1021 = vsel %vm944, %v1007, 0.0
    %1022 = vadd.xlane.f32.xlu0 %v1021
    %v1023 = vpop.xlane.xlu0 %1022
    %v1024 = vsel %vm944, %v1008, 0.0
    %1025 = vadd.xlane.f32.xlu0 %v1024
    %v1026 = vpop.xlane.xlu0 %1025
    %v1027 = vsel %vm944, %v1009, 0.0
    %1028 = vadd.xlane.f32.xlu0 %v1027
    %v1029 = vpop.xlane.xlu0 %1028
    %v1030 = vsel %vm944, %v1010, 0.0
    %1031 = vadd.xlane.f32.xlu0 %v1030
    %v1032 = vpop.xlane.xlu0 %1031
    %v1033 = vsel %vm944, %v1011, 0.0
    %1034 = vadd.xlane.f32.xlu0 %v1033
    %v1035 = vpop.xlane.xlu0 %1034
    %v1036 = vsel %vm944, %v1012, 0.0
    %1037 = vadd.xlane.f32.xlu0 %v1036
    %v1038 = vpop.xlane.xlu0 %1037
    %v1039 = vsel %vm944, %v1013, 0.0
    %1040 = vadd.xlane.f32.xlu0 %v1039
    %v1041 = vpop.xlane.xlu0 %1040
    %v1042 = vsel %vm944, %v1014, 0.0
    %1043 = vadd.xlane.f32.xlu0 %v1042
    %v1044 = vpop.xlane.xlu0 %1043
    %v1045 = vsel %vm944, %v1015, 0.0
    %1046 = vadd.xlane.f32.xlu0 %v1045
    %v1047 = vpop.xlane.xlu0 %1046
    %v1048 = vsel %vm944, %v1016, 0.0
    %1049 = vadd.xlane.f32.xlu0 %v1048
    %v1050 = vpop.xlane.xlu0 %1049
    %v1051 = vsel %vm944, %v1017, 0.0
    %1052 = vadd.xlane.f32.xlu0 %v1051
    %v1053 = vpop.xlane.xlu0 %1052
    %v1054 = vmul.f32 %v1020, %v981
    %v1055 = vmul.f32 %v1023, %v981
    %v1056 = vmul.f32 %v1026, %v981
    %v1057 = vmul.f32 %v1029, %v981
    %v1058 = vmul.f32 %v1032, %v981
    %v1059 = vmul.f32 %v1035, %v981
    %v1060 = vmul.f32 %v1038, %v981
    %v1061 = vmul.f32 %v1041, %v981
    %v1062 = vmul.f32 %v1044, %v981
    %v1063 = vmul.f32 %v1047, %v981
    %v1064 = vmul.f32 %v1050, %v981
    %v1065 = vmul.f32 %v1053, %v981
    %v1066 = vadd.f32 %v1054, 1e-05
    %v1067 = vadd.f32 %v1055, 1e-05
    %v1068 = vadd.f32 %v1056, 1e-05
    %v1069 = vadd.f32 %v1057, 1e-05
    %v1070 = vadd.f32 %v1058, 1e-05
    %v1071 = vadd.f32 %v1059, 1e-05
    %v1072 = vadd.f32 %v1060, 1e-05
    %v1073 = vadd.f32 %v1061, 1e-05
    %v1074 = vadd.f32 %v1062, 1e-05
    %v1075 = vadd.f32 %v1063, 1e-05
    %v1076 = vadd.f32 %v1064, 1e-05
    %v1077 = vadd.f32 %v1065, 1e-05
    %v1078 = vrsqrt.pop %v1066
    %v1079 = vrsqrt.pop %v1067
    %v1080 = vrsqrt.pop %v1068
    %v1081 = vrsqrt.pop %v1069
    %v1082 = vrsqrt.pop %v1070
    %v1083 = vrsqrt.pop %v1071
    %v1084 = vrsqrt.pop %v1072
    %v1085 = vrsqrt.pop %v1073
    %v1086 = vrsqrt.pop %v1074
    %v1087 = vrsqrt.pop %v1075
    %v1088 = vrsqrt.pop %v1076
    %v1089 = vrsqrt.pop %v1077
    %v1090 = vmul.f32 %v994, %v1078
    %v1091 = vmul.f32 %v995, %v1079
    %v1092 = vmul.f32 %v996, %v1080
    %v1093 = vmul.f32 %v997, %v1081
    %v1094 = vmul.f32 %v998, %v1082
    %v1095 = vmul.f32 %v999, %v1083
    %v1096 = vmul.f32 %v1000, %v1084
    %v1097 = vmul.f32 %v1001, %v1085
    %v1098 = vmul.f32 %v1002, %v1086
    %v1099 = vmul.f32 %v1003, %v1087
    %v1100 = vmul.f32 %v1004, %v1088
    %v1101 = vmul.f32 %v1005, %v1089
    %v1102 = vlaneseq
    %v1103 = vshrl.u32 %v1102, 7
    %v1104 = vsub.s32 0, %v1103
    %v1105 = vrot.slane %v415, %v1104
    %v1106 = vmul.f32 %v1090, %v1105
    %v1107 = vmul.f32 %v1091, %v1105
    %v1108 = vmul.f32 %v1092, %v1105
    %v1109 = vmul.f32 %v1093, %v1105
    %v1110 = vmul.f32 %v1094, %v1105
    %v1111 = vmul.f32 %v1095, %v1105
    %v1112 = vmul.f32 %v1096, %v1105
    %v1113 = vmul.f32 %v1097, %v1105
    %v1114 = vmul.f32 %v1098, %v1105
    %v1115 = vmul.f32 %v1099, %v1105
    %v1116 = vmul.f32 %v1100, %v1105
    %v1117 = vmul.f32 %v1101, %v1105
    %v1118 = vlaneseq
    %v1119 = vshrl.u32 %v1118, 7
    %v1120 = vsub.s32 0, %v1119
    %v1121 = vrot.slane %v416, %v1120
    %v1122 = vadd.f32 %v1106, %v1121
    %v1123 = vadd.f32 %v1107, %v1121
    %v1124 = vadd.f32 %v1108, %v1121
    %v1125 = vadd.f32 %v1109, %v1121
    %v1126 = vadd.f32 %v1110, %v1121
    %v1127 = vadd.f32 %v1111, %v1121
    %v1128 = vadd.f32 %v1112, %v1121
    %v1129 = vadd.f32 %v1113, %v1121
    %v1130 = vadd.f32 %v1114, %v1121
    %v1131 = vadd.f32 %v1115, %v1121
    %v1132 = vadd.f32 %v1116, %v1121
    %v1133 = vadd.f32 %v1117, %v1121
    %v1134 = vmax.f32 %v1122, 0.0
    %v1135 = vmax.f32 %v1123, 0.0
    %v1136 = vmax.f32 %v1124, 0.0
    %v1137 = vmax.f32 %v1125, 0.0
    %v1138 = vmax.f32 %v1126, 0.0
    %v1139 = vmax.f32 %v1127, 0.0
    %v1140 = vmax.f32 %v1128, 0.0
    %v1141 = vmax.f32 %v1129, 0.0
    %v1142 = vmax.f32 %v1130, 0.0
    %v1143 = vmax.f32 %v1131, 0.0
    %v1144 = vmax.f32 %v1132, 0.0
    %v1145 = vmax.f32 %v1133, 0.0
    %v1146 = vld [vmem:[%s9] sm:$0xff]
    %v1147 = vld [vmem:[%s9 + $0x8] sm:$0xff]
    %v1148 = vld [vmem:[%s9 + $0x10] sm:$0xff]
    %v1149 = vld [vmem:[%s9 + $0x18] sm:$0xff]
    %v1150 = vld [vmem:[%s9 + $0x20] sm:$0x3]
    %v1152 = vsel %vm944, %v1134, 0
    %v1155 = vsel %vm944, %v1135, 0
    %v1158 = vsel %vm944, %v1136, 0
    %v1161 = vsel %vm944, %v1137, 0
    %v1164 = vsel %vm944, %v1138, 0
    %v1167 = vsel %vm944, %v1139, 0
    %v1170 = vsel %vm944, %v1140, 0
    %v1173 = vsel %vm944, %v1141, 0
    %v1176 = vsel %vm944, %v1142, 0
    %v1179 = vsel %vm944, %v1143, 0
    %v1182 = vsel %vm944, %v1144, 0
    %v1185 = vsel %vm944, %v1145, 0
    %vm1187 = vcmask 1041408
    %v1189 = vsel %vm1187, %v1150, 0
    %1191 = vmatprep.subr.mxu0 0.0
    %1192 = vmatpush1.msra.mxu0 %v1146
    %1193 = vmatprep.subr.mxu0 0.0
    %1194 = vmatpush1.msra.mxu0 %v1147
    %1195 = vmatprep.subr.mxu0 0.0
    %1196 = vmatpush1.msra.mxu0 %v1148
    %1197 = vmatprep.subr.mxu0 0.0
    %1198 = vmatpush1.msra.mxu0 %v1149
    %1199 = vmatprep.subr.mxu0 0.0
    %1200 = vmatpush1.msra.mxu0 %v1189
    %1201 = vmatprep.subr.mxu0 0.0
    %1202 = vmatpush1.msra.mxu0 0.0
    %1203 = vmatprep.subr.mxu0 0.0
    %1204 = vmatpush1.msra.mxu0 0.0
    %1205 = vmatprep.subr.mxu0 0.0
    %1206 = vmatpush1.msra.mxu0 0.0
    %1207 = vmatprep.subr.mxu0 0.0
    %1208 = vmatpush1.msra.mxu0 0.0
    %1209 = vmatprep.subr.mxu0 0.0
    %1210 = vmatpush1.msra.mxu0 0.0
    %1211 = vmatprep.subr.mxu0 0.0
    %1212 = vmatpush1.msra.mxu0 0.0
    %1213 = vmatprep.subr.mxu0 0.0
    %1214 = vmatpush1.msra.mxu0 0.0
    %1215 = vmatprep.subr.mxu0 0.0
    %1216 = vmatpush1.msra.mxu0 0.0
    %1217 = vmatprep.subr.mxu0 0.0
    %1218 = vmatpush1.msra.mxu0 0.0
    %1219 = vmatprep.subr.mxu0 0.0
    %1220 = vmatpush1.msra.mxu0 0.0
    %1221 = vmatprep.subr.mxu0 0.0
    %1222 = vmatpush1.msra.mxu0 0.0
    %1223 = vmatprep.subr.mxu0 0.0
    %1224 = vmatpush1.msra.mxu0 0.0
    %1225 = vmatprep.subr.mxu0 0.0
    %1226 = vmatpush1.msra.mxu0 0.0
    %1227 = vmatprep.subr.mxu0 0.0
    %1228 = vmatpush1.msra.mxu0 0.0
    %1229 = vmatprep.subr.mxu0 0.0
    %1230 = vmatpush1.msra.mxu0 0.0
    %1231 = vmatprep.subr.mxu0 0.0
    %1232 = vmatpush1.msra.mxu0 0.0
    %1233 = vmatprep.subr.mxu0 0.0
    %1234 = vmatpush1.msra.mxu0 0.0
    %1235 = vmatprep.subr.mxu0 0.0
    %1236 = vmatpush1.msra.mxu0 0.0
    %1237 = vmatprep.subr.mxu0 0.0
    %1238 = vmatpush1.msra.mxu0 0.0
    %1239 = vmatprep.subr.mxu0 0.0
    %1240 = vmatpush1.msra.mxu0 0.0
    %1241 = vmatprep.subr.mxu0 0.0
    %1242 = vmatpush1.msra.mxu0 0.0
    %1243 = vmatprep.subr.mxu0 0.0
    %1244 = vmatpush1.msra.mxu0 0.0
    %1245 = vmatprep.subr.mxu0 0.0
    %1246 = vmatpush1.msra.mxu0 0.0
    %1247 = vmatprep.subr.mxu0 0.0
    %1248 = vmatpush1.msra.mxu0 0.0
    %1249 = vmatprep.subr.mxu0 0.0
    %1250 = vmatpush1.msra.mxu0 0.0
    %1251 = vmatprep.subr.mxu0 0.0
    %1252 = vmatpush1.msra.mxu0 0.0
    %1253 = vmatprep.subr.mxu0 0.0
    %1254 = vmatpush1.msra.mxu0 0.0
    %1255 = vmatprep.mubr.f32.mxu0 0.0
    %1256 = vmatmul.mubr.f32.gmra.mrb[0].mxu0 %v1152
    %v1257 = vpop.f32.mrb[0].mxu0
    %v1258 = vadd.f32 %v581, %v1257
    %v1259 = vpop.f32.mrb[0].mxu0
    %1260 = vmatprep.mubr.f32.mxu0 0.0
    %1261 = vmatmul.mubr.f32.gmra.mrb[0].mxu0 %v1155
    %v1262 = vpop.f32.mrb[0].mxu0
    %v1263 = vadd.f32 %v586, %v1262
    %v1264 = vpop.f32.mrb[0].mxu0
    %1265 = vmatprep.mubr.f32.mxu0 0.0
    %1266 = vmatmul.mubr.f32.gmra.mrb[0].mxu0 %v1158
    %v1267 = vpop.f32.mrb[0].mxu0
    %v1268 = vadd.f32 %v581, %v1267
    %v1269 = vpop.f32.mrb[0].mxu0
    %1270 = vmatprep.mubr.f32.mxu0 0.0
    %1271 = vmatmul.mubr.f32.gmra.mrb[0].mxu0 %v1161
    %v1272 = vpop.f32.mrb[0].mxu0
    %v1273 = vadd.f32 %v586, %v1272
    %v1274 = vpop.f32.mrb[0].mxu0
    %1275 = vmatprep.mubr.f32.mxu0 0.0
    %1276 = vmatmul.mubr.f32.gmra.mrb[0].mxu0 %v1164
    %v1277 = vpop.f32.mrb[0].mxu0
    %v1278 = vadd.f32 %v581, %v1277
    %v1279 = vpop.f32.mrb[0].mxu0
    %1280 = vmatprep.mubr.f32.mxu0 0.0
    %1281 = vmatmul.mubr.f32.gmra.mrb[0].mxu0 %v1167
    %v1282 = vpop.f32.mrb[0].mxu0
    %v1283 = vadd.f32 %v586, %v1282
    %v1284 = vpop.f32.mrb[0].mxu0
    %1285 = vmatprep.mubr.f32.mxu0 0.0
    %1286 = vmatmul.mubr.f32.gmra.mrb[0].mxu0 %v1170
    %v1287 = vpop.f32.mrb[0].mxu0
    %v1288 = vadd.f32 %v581, %v1287
    %v1289 = vpop.f32.mrb[0].mxu0
    %1290 = vmatprep.mubr.f32.mxu0 0.0
    %1291 = vmatmul.mubr.f32.gmra.mrb[0].mxu0 %v1173
    %v1292 = vpop.f32.mrb[0].mxu0
    %v1293 = vadd.f32 %v586, %v1292
    %v1294 = vpop.f32.mrb[0].mxu0
    %1295 = vmatprep.mubr.f32.mxu0 0.0
    %1296 = vmatmul.mubr.f32.gmra.mrb[0].mxu0 %v1176
    %v1297 = vpop.f32.mrb[0].mxu0
    %v1298 = vadd.f32 %v581, %v1297
    %v1299 = vpop.f32.mrb[0].mxu0
    %1300 = vmatprep.mubr.f32.mxu0 0.0
    %1301 = vmatmul.mubr.f32.gmra.mrb[0].mxu0 %v1179
    %v1302 = vpop.f32.mrb[0].mxu0
    %v1303 = vadd.f32 %v586, %v1302
    %v1304 = vpop.f32.mrb[0].mxu0
    %1305 = vmatprep.mubr.f32.mxu0 0.0
    %1306 = vmatmul.mubr.f32.gmra.mrb[0].mxu0 %v1182
    %v1307 = vpop.f32.mrb[0].mxu0
    %v1308 = vadd.f32 %v581, %v1307
    %v1309 = vpop.f32.mrb[0].mxu0
    %1310 = vmatprep.mubr.f32.mxu0 0.0
    %1311 = vmatmul.mubr.f32.gmra.mrb[0].mxu0 %v1185
    %v1312 = vpop.f32.mrb[0].mxu0
    %v1313 = vadd.f32 %v586, %v1312
    %v1314 = vpop.f32.mrb[0].mxu0
    %1315 = vdwg.mxu0
    %v1316 = vld [vmem:[%s11] sm:$0x1]
    %v1317 = vlaneseq
    %v1318 = vshrl.u32 %v1317, 7
    %v1319 = vsub.s32 0, %v1318
    %v1320 = vrot.slane %v1316, %v1319
    %v1321 = vmul.f32 %v793, %v1320
    %v1322 = vmul.f32 %v797, %v1320
    %v1323 = vmul.f32 %v801, %v1320
    %v1324 = vmul.f32 %v805, %v1320
    %v1325 = vmul.f32 %v809, %v1320
    %v1326 = vmul.f32 %v813, %v1320
    %v1327 = vmul.f32 %v817, %v1320
    %v1328 = vmul.f32 %v821, %v1320
    %v1329 = vmul.f32 %v825, %v1320
    %v1330 = vmul.f32 %v829, %v1320
    %v1331 = vmul.f32 %v833, %v1320
    %v1332 = vmul.f32 %v837, %v1320
    %v1333 = vadd.f32 %v1258, %v1321
    %v1334 = vadd.f32 %v1263, %v1322
    %v1335 = vadd.f32 %v1268, %v1323
    %v1336 = vadd.f32 %v1273, %v1324
    %v1337 = vadd.f32 %v1278, %v1325
    %v1338 = vadd.f32 %v1283, %v1326
    %v1339 = vadd.f32 %v1288, %v1327
    %v1340 = vadd.f32 %v1293, %v1328
    %v1341 = vadd.f32 %v1298, %v1329
    %v1342 = vadd.f32 %v1303, %v1330
    %v1343 = vadd.f32 %v1308, %v1331
    %v1344 = vadd.f32 %v1313, %v1332
    %v1345 = vld [vmem:[%s11 + $0x1] sm:$0x1]
    %v1346 = vlaneseq
    %v1347 = vshrl.u32 %v1346, 7
    %v1348 = vsub.s32 0, %v1347
    %v1349 = vrot.slane %v1345, %v1348
    %v1350 = vmul.f32 %v870, %v1349
    %v1351 = vmul.f32 %v874, %v1349
    %v1352 = vmul.f32 %v878, %v1349
    %v1353 = vmul.f32 %v882, %v1349
    %v1354 = vmul.f32 %v886, %v1349
    %v1355 = vmul.f32 %v890, %v1349
    %v1356 = vmul.f32 %v894, %v1349
    %v1357 = vmul.f32 %v898, %v1349
    %v1358 = vmul.f32 %v902, %v1349
    %v1359 = vmul.f32 %v906, %v1349
    %v1360 = vmul.f32 %v910, %v1349
    %v1361 = vmul.f32 %v914, %v1349
    %v1362 = vadd.f32 %v1333, %v1350
    %v1363 = vadd.f32 %v1334, %v1351
    %v1364 = vadd.f32 %v1335, %v1352
    %v1365 = vadd.f32 %v1336, %v1353
    %v1366 = vadd.f32 %v1337, %v1354
    %v1367 = vadd.f32 %v1338, %v1355
    %v1368 = vadd.f32 %v1339, %v1356
    %v1369 = vadd.f32 %v1340, %v1357
    %v1370 = vadd.f32 %v1341, %v1358
    %v1371 = vadd.f32 %v1342, %v1359
    %v1372 = vadd.f32 %v1343, %v1360
    %v1373 = vadd.f32 %v1344, %v1361
    %v1374 = vadd.f32 %v412, %v1362
    %v1375 = vadd.f32 %v413, %v1363
    %v1376 = vadd.f32 %v761, %v1364
    %v1377 = vadd.f32 %v763, %v1365
    %v1378 = vadd.f32 %v767, %v1366
    %v1379 = vadd.f32 %v769, %v1367
    %v1380 = vadd.f32 %v773, %v1368
    %v1381 = vadd.f32 %v775, %v1369
    %v1382 = vadd.f32 %v779, %v1370
    %v1383 = vadd.f32 %v781, %v1371
    %v1384 = vadd.f32 %v785, %v1372
    %v1385 = vadd.f32 %v787, %v1373
    %v1386 = vld [vmem:[%s14] sm:$0x1]
    %1388 = vset.pattern.permute.xlu0 0
    %1389 = vperm.xlu0 %1388, %v1374
    %v1390 = vpop.permute.xlu0 %1389
    %1393 = vset.pattern.permute.xlu0 0
    %1394 = vperm.xlu0 %1393, %v1375
    %v1395 = vpop.permute.xlu0 %1394
    %1398 = vset.pattern.permute.xlu0 0
    %1399 = vperm.xlu0 %1398, %v1376
    %v1400 = vpop.permute.xlu0 %1399
    %1403 = vset.pattern.permute.xlu0 0
    %1404 = vperm.xlu0 %1403, %v1377
    %v1405 = vpop.permute.xlu0 %1404
    %1408 = vset.pattern.permute.xlu0 0
    %1409 = vperm.xlu0 %1408, %v1378
    %v1410 = vpop.permute.xlu0 %1409
    %1413 = vset.pattern.permute.xlu0 0
    %1414 = vperm.xlu0 %1413, %v1379
    %v1415 = vpop.permute.xlu0 %1414
    %1418 = vset.pattern.permute.xlu0 0
    %1419 = vperm.xlu0 %1418, %v1380
    %v1420 = vpop.permute.xlu0 %1419
    %1423 = vset.pattern.permute.xlu0 0
    %1424 = vperm.xlu0 %1423, %v1381
    %v1425 = vpop.permute.xlu0 %1424
    %1428 = vset.pattern.permute.xlu0 0
    %1429 = vperm.xlu0 %1428, %v1382
    %v1430 = vpop.permute.xlu0 %1429
    %1433 = vset.pattern.permute.xlu0 0
    %1434 = vperm.xlu0 %1433, %v1383
    %v1435 = vpop.permute.xlu0 %1434
    %1438 = vset.pattern.permute.xlu0 0
    %1439 = vperm.xlu0 %1438, %v1384
    %v1440 = vpop.permute.xlu0 %1439
    %1443 = vset.pattern.permute.xlu0 0
    %1444 = vperm.xlu0 %1443, %v1385
    %v1445 = vpop.permute.xlu0 %1444
    %v1447 = vlaneseq
    %v1448 = vshrl.u32 %v1447, 7
    %v1449 = vsub.s32 0, %v1448
    %v1450 = vrot.slane %v1386, %v1449
    %v1451 = vmul.f32 %v1390, %v1450
    %v1452 = vmul.f32 %v1395, %v1450
    %v1453 = vmul.f32 %v1400, %v1450
    %v1454 = vmul.f32 %v1405, %v1450
    %v1455 = vmul.f32 %v1410, %v1450
    %v1456 = vmul.f32 %v1415, %v1450
    %v1457 = vmul.f32 %v1420, %v1450
    %v1458 = vmul.f32 %v1425, %v1450
    %v1459 = vmul.f32 %v1430, %v1450
    %v1460 = vmul.f32 %v1435, %v1450
    %v1461 = vmul.f32 %v1440, %v1450
    %v1462 = vmul.f32 %v1445, %v1450
    %v1463 = vadd.f32 %v664, %v1451
    %v1464 = vadd.f32 %v669, %v1452
    %v1465 = vadd.f32 %v664, %v1453
    %v1466 = vadd.f32 %v669, %v1454
    %v1467 = vadd.f32 %v664, %v1455
    %v1468 = vadd.f32 %v669, %v1456
    %v1469 = vadd.f32 %v664, %v1457
    %v1470 = vadd.f32 %v669, %v1458
    %v1471 = vadd.f32 %v664, %v1459
    %v1472 = vadd.f32 %v669, %v1460
    %v1473 = vadd.f32 %v664, %v1461
    %v1474 = vadd.f32 %v669, %v1462
    %v1475 = vld [vmem:[%s14 + $0x1] sm:$0x1]
    %1476 = vset.pattern.permute.xlu0 1
    %1477 = vperm.xlu0 %1476, %v1374
    %v1478 = vpop.permute.xlu0 %1477
    %1480 = vset.pattern.permute.xlu0 1
    %1481 = vperm.xlu0 %1480, %v1375
    %v1482 = vpop.permute.xlu0 %1481
    %1484 = vset.pattern.permute.xlu0 1
    %1485 = vperm.xlu0 %1484, %v1376
    %v1486 = vpop.permute.xlu0 %1485
    %1488 = vset.pattern.permute.xlu0 1
    %1489 = vperm.xlu0 %1488, %v1377
    %v1490 = vpop.permute.xlu0 %1489
    %1492 = vset.pattern.permute.xlu0 1
    %1493 = vperm.xlu0 %1492, %v1378
    %v1494 = vpop.permute.xlu0 %1493
    %1496 = vset.pattern.permute.xlu0 1
    %1497 = vperm.xlu0 %1496, %v1379
    %v1498 = vpop.permute.xlu0 %1497
    %1500 = vset.pattern.permute.xlu0 1
    %1501 = vperm.xlu0 %1500, %v1380
    %v1502 = vpop.permute.xlu0 %1501
    %1504 = vset.pattern.permute.xlu0 1
    %1505 = vperm.xlu0 %1504, %v1381
    %v1506 = vpop.permute.xlu0 %1505
    %1508 = vset.pattern.permute.xlu0 1
    %1509 = vperm.xlu0 %1508, %v1382
    %v1510 = vpop.permute.xlu0 %1509
    %1512 = vset.pattern.permute.xlu0 1
    %1513 = vperm.xlu0 %1512, %v1383
    %v1514 = vpop.permute.xlu0 %1513
    %1516 = vset.pattern.permute.xlu0 1
    %1517 = vperm.xlu0 %1516, %v1384
    %v1518 = vpop.permute.xlu0 %1517
    %1520 = vset.pattern.permute.xlu0 1
    %1521 = vperm.xlu0 %1520, %v1385
    %v1522 = vpop.permute.xlu0 %1521
    %v1524 = vlaneseq
    %v1525 = vshrl.u32 %v1524, 7
    %v1526 = vsub.s32 0, %v1525
    %v1527 = vrot.slane %v1475, %v1526
    %v1528 = vmul.f32 %v1478, %v1527
    %v1529 = vmul.f32 %v1482, %v1527
    %v1530 = vmul.f32 %v1486, %v1527
    %v1531 = vmul.f32 %v1490, %v1527
    %v1532 = vmul.f32 %v1494, %v1527
    %v1533 = vmul.f32 %v1498, %v1527
    %v1534 = vmul.f32 %v1502, %v1527
    %v1535 = vmul.f32 %v1506, %v1527
    %v1536 = vmul.f32 %v1510, %v1527
    %v1537 = vmul.f32 %v1514, %v1527
    %v1538 = vmul.f32 %v1518, %v1527
    %v1539 = vmul.f32 %v1522, %v1527
    %v1540 = vadd.f32 %v1463, %v1528
    %v1541 = vadd.f32 %v1464, %v1529
    %v1542 = vadd.f32 %v1465, %v1530
    %v1543 = vadd.f32 %v1466, %v1531
    %v1544 = vadd.f32 %v1467, %v1532
    %v1545 = vadd.f32 %v1468, %v1533
    %v1546 = vadd.f32 %v1469, %v1534
    %v1547 = vadd.f32 %v1470, %v1535
    %v1548 = vadd.f32 %v1471, %v1536
    %v1549 = vadd.f32 %v1472, %v1537
    %v1550 = vadd.f32 %v1473, %v1538
    %v1551 = vadd.f32 %v1474, %v1539
    %v1552 = vsel %vm944, %v1540, 0.0
    %1553 = vadd.xlane.f32.xlu0 %v1552
    %v1554 = vpop.xlane.xlu0 %1553
    %v1555 = vsel %vm944, %v1541, 0.0
    %1556 = vadd.xlane.f32.xlu0 %v1555
    %v1557 = vpop.xlane.xlu0 %1556
    %v1558 = vsel %vm944, %v1542, 0.0
    %1559 = vadd.xlane.f32.xlu0 %v1558
    %v1560 = vpop.xlane.xlu0 %1559
    %v1561 = vsel %vm944, %v1543, 0.0
    %1562 = vadd.xlane.f32.xlu0 %v1561
    %v1563 = vpop.xlane.xlu0 %1562
    %v1564 = vsel %vm944, %v1544, 0.0
    %1565 = vadd.xlane.f32.xlu0 %v1564
    %v1566 = vpop.xlane.xlu0 %1565
    %v1567 = vsel %vm944, %v1545, 0.0
    %1568 = vadd.xlane.f32.xlu0 %v1567
    %v1569 = vpop.xlane.xlu0 %1568
    %v1570 = vsel %vm944, %v1546, 0.0
    %1571 = vadd.xlane.f32.xlu0 %v1570
    %v1572 = vpop.xlane.xlu0 %1571
    %v1573 = vsel %vm944, %v1547, 0.0
    %1574 = vadd.xlane.f32.xlu0 %v1573
    %v1575 = vpop.xlane.xlu0 %1574
    %v1576 = vsel %vm944, %v1548, 0.0
    %1577 = vadd.xlane.f32.xlu0 %v1576
    %v1578 = vpop.xlane.xlu0 %1577
    %v1579 = vsel %vm944, %v1549, 0.0
    %1580 = vadd.xlane.f32.xlu0 %v1579
    %v1581 = vpop.xlane.xlu0 %1580
    %v1582 = vsel %vm944, %v1550, 0.0
    %1583 = vadd.xlane.f32.xlu0 %v1582
    %v1584 = vpop.xlane.xlu0 %1583
    %v1585 = vsel %vm944, %v1551, 0.0
    %1586 = vadd.xlane.f32.xlu0 %v1585
    %v1587 = vpop.xlane.xlu0 %1586
    %v1588 = vmul.f32 %v1554, %v981
    %v1589 = vmul.f32 %v1557, %v981
    %v1590 = vmul.f32 %v1560, %v981
    %v1591 = vmul.f32 %v1563, %v981
    %v1592 = vmul.f32 %v1566, %v981
    %v1593 = vmul.f32 %v1569, %v981
    %v1594 = vmul.f32 %v1572, %v981
    %v1595 = vmul.f32 %v1575, %v981
    %v1596 = vmul.f32 %v1578, %v981
    %v1597 = vmul.f32 %v1581, %v981
    %v1598 = vmul.f32 %v1584, %v981
    %v1599 = vmul.f32 %v1587, %v981
    %v1600 = vsub.f32 %v1540, %v1588
    %v1601 = vsub.f32 %v1541, %v1589
    %v1602 = vsub.f32 %v1542, %v1590
    %v1603 = vsub.f32 %v1543, %v1591
    %v1604 = vsub.f32 %v1544, %v1592
    %v1605 = vsub.f32 %v1545, %v1593
    %v1606 = vsub.f32 %v1546, %v1594
    %v1607 = vsub.f32 %v1547, %v1595
    %v1608 = vsub.f32 %v1548, %v1596
    %v1609 = vsub.f32 %v1549, %v1597
    %v1610 = vsub.f32 %v1550, %v1598
    %v1611 = vsub.f32 %v1551, %v1599
    %v1612 = vmul.f32 %v1600, %v1600
    %v1613 = vmul.f32 %v1601, %v1601
    %v1614 = vmul.f32 %v1602, %v1602
    %v1615 = vmul.f32 %v1603, %v1603
    %v1616 = vmul.f32 %v1604, %v1604
    %v1617 = vmul.f32 %v1605, %v1605
    %v1618 = vmul.f32 %v1606, %v1606
    %v1619 = vmul.f32 %v1607, %v1607
    %v1620 = vmul.f32 %v1608, %v1608
    %v1621 = vmul.f32 %v1609, %v1609
    %v1622 = vmul.f32 %v1610, %v1610
    %v1623 = vmul.f32 %v1611, %v1611
    %v1624 = vsel %vm944, %v1612, 0.0
    %1625 = vadd.xlane.f32.xlu0 %v1624
    %v1626 = vpop.xlane.xlu0 %1625
    %v1627 = vsel %vm944, %v1613, 0.0
    %1628 = vadd.xlane.f32.xlu0 %v1627
    %v1629 = vpop.xlane.xlu0 %1628
    %v1630 = vsel %vm944, %v1614, 0.0
    %1631 = vadd.xlane.f32.xlu0 %v1630
    %v1632 = vpop.xlane.xlu0 %1631
    %v1633 = vsel %vm944, %v1615, 0.0
    %1634 = vadd.xlane.f32.xlu0 %v1633
    %v1635 = vpop.xlane.xlu0 %1634
    %v1636 = vsel %vm944, %v1616, 0.0
    %1637 = vadd.xlane.f32.xlu0 %v1636
    %v1638 = vpop.xlane.xlu0 %1637
    %v1639 = vsel %vm944, %v1617, 0.0
    %1640 = vadd.xlane.f32.xlu0 %v1639
    %v1641 = vpop.xlane.xlu0 %1640
    %v1642 = vsel %vm944, %v1618, 0.0
    %1643 = vadd.xlane.f32.xlu0 %v1642
    %v1644 = vpop.xlane.xlu0 %1643
    %v1645 = vsel %vm944, %v1619, 0.0
    %1646 = vadd.xlane.f32.xlu0 %v1645
    %v1647 = vpop.xlane.xlu0 %1646
    %v1648 = vsel %vm944, %v1620, 0.0
    %1649 = vadd.xlane.f32.xlu0 %v1648
    %v1650 = vpop.xlane.xlu0 %1649
    %v1651 = vsel %vm944, %v1621, 0.0
    %1652 = vadd.xlane.f32.xlu0 %v1651
    %v1653 = vpop.xlane.xlu0 %1652
    %v1654 = vsel %vm944, %v1622, 0.0
    %1655 = vadd.xlane.f32.xlu0 %v1654
    %v1656 = vpop.xlane.xlu0 %1655
    %v1657 = vsel %vm944, %v1623, 0.0
    %1658 = vadd.xlane.f32.xlu0 %v1657
    %v1659 = vpop.xlane.xlu0 %1658
    %v1660 = vmul.f32 %v1626, %v981
    %v1661 = vmul.f32 %v1629, %v981
    %v1662 = vmul.f32 %v1632, %v981
    %v1663 = vmul.f32 %v1635, %v981
    %v1664 = vmul.f32 %v1638, %v981
    %v1665 = vmul.f32 %v1641, %v981
    %v1666 = vmul.f32 %v1644, %v981
    %v1667 = vmul.f32 %v1647, %v981
    %v1668 = vmul.f32 %v1650, %v981
    %v1669 = vmul.f32 %v1653, %v981
    %v1670 = vmul.f32 %v1656, %v981
    %v1671 = vmul.f32 %v1659, %v981
    %v1672 = vadd.f32 %v1660, 1e-05
    %v1673 = vadd.f32 %v1661, 1e-05
    %v1674 = vadd.f32 %v1662, 1e-05
    %v1675 = vadd.f32 %v1663, 1e-05
    %v1676 = vadd.f32 %v1664, 1e-05
    %v1677 = vadd.f32 %v1665, 1e-05
    %v1678 = vadd.f32 %v1666, 1e-05
    %v1679 = vadd.f32 %v1667, 1e-05
    %v1680 = vadd.f32 %v1668, 1e-05
    %v1681 = vadd.f32 %v1669, 1e-05
    %v1682 = vadd.f32 %v1670, 1e-05
    %v1683 = vadd.f32 %v1671, 1e-05
    %v1684 = vrsqrt.pop %v1672
    %v1685 = vrsqrt.pop %v1673
    %v1686 = vrsqrt.pop %v1674
    %v1687 = vrsqrt.pop %v1675
    %v1688 = vrsqrt.pop %v1676
    %v1689 = vrsqrt.pop %v1677
    %v1690 = vrsqrt.pop %v1678
    %v1691 = vrsqrt.pop %v1679
    %v1692 = vrsqrt.pop %v1680
    %v1693 = vrsqrt.pop %v1681
    %v1694 = vrsqrt.pop %v1682
    %v1695 = vrsqrt.pop %v1683
    %v1696 = vmul.f32 %v1600, %v1684
    %v1697 = vmul.f32 %v1601, %v1685
    %v1698 = vmul.f32 %v1602, %v1686
    %v1699 = vmul.f32 %v1603, %v1687
    %v1700 = vmul.f32 %v1604, %v1688
    %v1701 = vmul.f32 %v1605, %v1689
    %v1702 = vmul.f32 %v1606, %v1690
    %v1703 = vmul.f32 %v1607, %v1691
    %v1704 = vmul.f32 %v1608, %v1692
    %v1705 = vmul.f32 %v1609, %v1693
    %v1706 = vmul.f32 %v1610, %v1694
    %v1707 = vmul.f32 %v1611, %v1695
    %v1708 = vlaneseq
    %v1709 = vshrl.u32 %v1708, 7
    %v1710 = vsub.s32 0, %v1709
    %v1711 = vrot.slane %v418, %v1710
    %v1712 = vmul.f32 %v1696, %v1711
    %v1713 = vmul.f32 %v1697, %v1711
    %v1714 = vmul.f32 %v1698, %v1711
    %v1715 = vmul.f32 %v1699, %v1711
    %v1716 = vmul.f32 %v1700, %v1711
    %v1717 = vmul.f32 %v1701, %v1711
    %v1718 = vmul.f32 %v1702, %v1711
    %v1719 = vmul.f32 %v1703, %v1711
    %v1720 = vmul.f32 %v1704, %v1711
    %v1721 = vmul.f32 %v1705, %v1711
    %v1722 = vmul.f32 %v1706, %v1711
    %v1723 = vmul.f32 %v1707, %v1711
    %v1724 = vlaneseq
    %v1725 = vshrl.u32 %v1724, 7
    %v1726 = vsub.s32 0, %v1725
    %v1727 = vrot.slane %v419, %v1726
    %v1728 = vadd.f32 %v1712, %v1727
    %v1729 = vadd.f32 %v1713, %v1727
    %v1730 = vadd.f32 %v1714, %v1727
    %v1731 = vadd.f32 %v1715, %v1727
    %v1732 = vadd.f32 %v1716, %v1727
    %v1733 = vadd.f32 %v1717, %v1727
    %v1734 = vadd.f32 %v1718, %v1727
    %v1735 = vadd.f32 %v1719, %v1727
    %v1736 = vadd.f32 %v1720, %v1727
    %v1737 = vadd.f32 %v1721, %v1727
    %v1738 = vadd.f32 %v1722, %v1727
    %v1739 = vadd.f32 %v1723, %v1727
    %v1740 = vmax.f32 %v1728, 0.0
    %v1741 = vmax.f32 %v1729, 0.0
    %v1742 = vmax.f32 %v1730, 0.0
    %v1743 = vmax.f32 %v1731, 0.0
    %v1744 = vmax.f32 %v1732, 0.0
    %v1745 = vmax.f32 %v1733, 0.0
    %v1746 = vmax.f32 %v1734, 0.0
    %v1747 = vmax.f32 %v1735, 0.0
    %v1748 = vmax.f32 %v1736, 0.0
    %v1749 = vmax.f32 %v1737, 0.0
    %v1750 = vmax.f32 %v1738, 0.0
    %v1751 = vmax.f32 %v1739, 0.0
    %v1752 = vld [vmem:[%s16] sm:$0xff]
    %v1753 = vld [vmem:[%s16 + $0x8] sm:$0xff]
    %v1754 = vld [vmem:[%s16 + $0x10] sm:$0xff]
    %v1755 = vld [vmem:[%s16 + $0x18] sm:$0xff]
    %v1756 = vld [vmem:[%s16 + $0x20] sm:$0x3]
    %v1758 = vsel %vm944, %v1740, 0
    %v1761 = vsel %vm944, %v1741, 0
    %v1764 = vsel %vm944, %v1742, 0
    %v1767 = vsel %vm944, %v1743, 0
    %v1770 = vsel %vm944, %v1744, 0
    %v1773 = vsel %vm944, %v1745, 0
    %v1776 = vsel %vm944, %v1746, 0
    %v1779 = vsel %vm944, %v1747, 0
    %v1782 = vsel %vm944, %v1748, 0
    %v1785 = vsel %vm944, %v1749, 0
    %v1788 = vsel %vm944, %v1750, 0
    %v1791 = vsel %vm944, %v1751, 0
    %v1794 = vsel %vm1187, %v1756, 0
    %1796 = vmatprep.subr.mxu0 0.0
    %1797 = vmatpush1.msra.mxu0 %v1752
    %1798 = vmatprep.subr.mxu0 0.0
    %1799 = vmatpush1.msra.mxu0 %v1753
    %1800 = vmatprep.subr.mxu0 0.0
    %1801 = vmatpush1.msra.mxu0 %v1754
    %1802 = vmatprep.subr.mxu0 0.0
    %1803 = vmatpush1.msra.mxu0 %v1755
    %1804 = vmatprep.subr.mxu0 0.0
    %1805 = vmatpush1.msra.mxu0 %v1794
    %1806 = vmatprep.subr.mxu0 0.0
    %1807 = vmatpush1.msra.mxu0 0.0
    %1808 = vmatprep.subr.mxu0 0.0
    %1809 = vmatpush1.msra.mxu0 0.0
    %1810 = vmatprep.subr.mxu0 0.0
    %1811 = vmatpush1.msra.mxu0 0.0
    %1812 = vmatprep.subr.mxu0 0.0
    %1813 = vmatpush1.msra.mxu0 0.0
    %1814 = vmatprep.subr.mxu0 0.0
    %1815 = vmatpush1.msra.mxu0 0.0
    %1816 = vmatprep.subr.mxu0 0.0
    %1817 = vmatpush1.msra.mxu0 0.0
    %1818 = vmatprep.subr.mxu0 0.0
    %1819 = vmatpush1.msra.mxu0 0.0
    %1820 = vmatprep.subr.mxu0 0.0
    %1821 = vmatpush1.msra.mxu0 0.0
    %1822 = vmatprep.subr.mxu0 0.0
    %1823 = vmatpush1.msra.mxu0 0.0
    %1824 = vmatprep.subr.mxu0 0.0
    %1825 = vmatpush1.msra.mxu0 0.0
    %1826 = vmatprep.subr.mxu0 0.0
    %1827 = vmatpush1.msra.mxu0 0.0
    %1828 = vmatprep.subr.mxu0 0.0
    %1829 = vmatpush1.msra.mxu0 0.0
    %1830 = vmatprep.subr.mxu0 0.0
    %1831 = vmatpush1.msra.mxu0 0.0
    %1832 = vmatprep.subr.mxu0 0.0
    %1833 = vmatpush1.msra.mxu0 0.0
    %1834 = vmatprep.subr.mxu0 0.0
    %1835 = vmatpush1.msra.mxu0 0.0
    %1836 = vmatprep.subr.mxu0 0.0
    %1837 = vmatpush1.msra.mxu0 0.0
    %1838 = vmatprep.subr.mxu0 0.0
    %1839 = vmatpush1.msra.mxu0 0.0
    %1840 = vmatprep.subr.mxu0 0.0
    %1841 = vmatpush1.msra.mxu0 0.0
    %1842 = vmatprep.subr.mxu0 0.0
    %1843 = vmatpush1.msra.mxu0 0.0
    %1844 = vmatprep.subr.mxu0 0.0
    %1845 = vmatpush1.msra.mxu0 0.0
    %1846 = vmatprep.subr.mxu0 0.0
    %1847 = vmatpush1.msra.mxu0 0.0
    %1848 = vmatprep.subr.mxu0 0.0
    %1849 = vmatpush1.msra.mxu0 0.0
    %1850 = vmatprep.subr.mxu0 0.0
    %1851 = vmatpush1.msra.mxu0 0.0
    %1852 = vmatprep.subr.mxu0 0.0
    %1853 = vmatpush1.msra.mxu0 0.0
    %1854 = vmatprep.subr.mxu0 0.0
    %1855 = vmatpush1.msra.mxu0 0.0
    %1856 = vmatprep.subr.mxu0 0.0
    %1857 = vmatpush1.msra.mxu0 0.0
    %1858 = vmatprep.subr.mxu0 0.0
    %1859 = vmatpush1.msra.mxu0 0.0
    %1860 = vmatprep.mubr.f32.mxu0 0.0
    %1861 = vmatmul.mubr.f32.gmra.mrb[0].mxu0 %v1758
    %v1862 = vpop.f32.mrb[0].mxu0
    %v1863 = vadd.f32 %v750, %v1862
    %v1864 = vpop.f32.mrb[0].mxu0
    %1865 = vmatprep.mubr.f32.mxu0 0.0
    %1866 = vmatmul.mubr.f32.gmra.mrb[0].mxu0 %v1761
    %v1867 = vpop.f32.mrb[0].mxu0
    %v1868 = vadd.f32 %v755, %v1867
    %v1869 = vpop.f32.mrb[0].mxu0
    %1870 = vmatprep.mubr.f32.mxu0 0.0
    %1871 = vmatmul.mubr.f32.gmra.mrb[0].mxu0 %v1764
    %v1872 = vpop.f32.mrb[0].mxu0
    %v1873 = vadd.f32 %v750, %v1872
    %v1874 = vpop.f32.mrb[0].mxu0
    %1875 = vmatprep.mubr.f32.mxu0 0.0
    %1876 = vmatmul.mubr.f32.gmra.mrb[0].mxu0 %v1767
    %v1877 = vpop.f32.mrb[0].mxu0
    %v1878 = vadd.f32 %v755, %v1877
    %v1879 = vpop.f32.mrb[0].mxu0
    %1880 = vmatprep.mubr.f32.mxu0 0.0
    %1881 = vmatmul.mubr.f32.gmra.mrb[0].mxu0 %v1770
    %v1882 = vpop.f32.mrb[0].mxu0
    %v1883 = vadd.f32 %v750, %v1882
    %v1884 = vpop.f32.mrb[0].mxu0
    %1885 = vmatprep.mubr.f32.mxu0 0.0
    %1886 = vmatmul.mubr.f32.gmra.mrb[0].mxu0 %v1773
    %v1887 = vpop.f32.mrb[0].mxu0
    %v1888 = vadd.f32 %v755, %v1887
    %v1889 = vpop.f32.mrb[0].mxu0
    %1890 = vmatprep.mubr.f32.mxu0 0.0
    %1891 = vmatmul.mubr.f32.gmra.mrb[0].mxu0 %v1776
    %v1892 = vpop.f32.mrb[0].mxu0
    %v1893 = vadd.f32 %v750, %v1892
    %v1894 = vpop.f32.mrb[0].mxu0
    %1895 = vmatprep.mubr.f32.mxu0 0.0
    %1896 = vmatmul.mubr.f32.gmra.mrb[0].mxu0 %v1779
    %v1897 = vpop.f32.mrb[0].mxu0
    %v1898 = vadd.f32 %v755, %v1897
    %v1899 = vpop.f32.mrb[0].mxu0
    %1900 = vmatprep.mubr.f32.mxu0 0.0
    %1901 = vmatmul.mubr.f32.gmra.mrb[0].mxu0 %v1782
    %v1902 = vpop.f32.mrb[0].mxu0
    %v1903 = vadd.f32 %v750, %v1902
    %v1904 = vpop.f32.mrb[0].mxu0
    %1905 = vmatprep.mubr.f32.mxu0 0.0
    %1906 = vmatmul.mubr.f32.gmra.mrb[0].mxu0 %v1785
    %v1907 = vpop.f32.mrb[0].mxu0
    %v1908 = vadd.f32 %v755, %v1907
    %v1909 = vpop.f32.mrb[0].mxu0
    %1910 = vmatprep.mubr.f32.mxu0 0.0
    %1911 = vmatmul.mubr.f32.gmra.mrb[0].mxu0 %v1788
    %v1912 = vpop.f32.mrb[0].mxu0
    %v1913 = vadd.f32 %v750, %v1912
    %v1914 = vpop.f32.mrb[0].mxu0
    %1915 = vmatprep.mubr.f32.mxu0 0.0
    %1916 = vmatmul.mubr.f32.gmra.mrb[0].mxu0 %v1791
    %v1917 = vpop.f32.mrb[0].mxu0
    %v1918 = vadd.f32 %v755, %v1917
    %v1919 = vpop.f32.mrb[0].mxu0
    %1920 = vdwg.mxu0
    %v1921 = vld [vmem:[%s18] sm:$0x1]
    %v1922 = vlaneseq
    %v1923 = vshrl.u32 %v1922, 7
    %v1924 = vsub.s32 0, %v1923
    %v1925 = vrot.slane %v1921, %v1924
    %v1926 = vmul.f32 %v1390, %v1925
    %v1927 = vmul.f32 %v1395, %v1925
    %v1928 = vmul.f32 %v1400, %v1925
    %v1929 = vmul.f32 %v1405, %v1925
    %v1930 = vmul.f32 %v1410, %v1925
    %v1931 = vmul.f32 %v1415, %v1925
    %v1932 = vmul.f32 %v1420, %v1925
    %v1933 = vmul.f32 %v1425, %v1925
    %v1934 = vmul.f32 %v1430, %v1925
    %v1935 = vmul.f32 %v1435, %v1925
    %v1936 = vmul.f32 %v1440, %v1925
    %v1937 = vmul.f32 %v1445, %v1925
    %v1938 = vadd.f32 %v1863, %v1926
    %v1939 = vadd.f32 %v1868, %v1927
    %v1940 = vadd.f32 %v1873, %v1928
    %v1941 = vadd.f32 %v1878, %v1929
    %v1942 = vadd.f32 %v1883, %v1930
    %v1943 = vadd.f32 %v1888, %v1931
    %v1944 = vadd.f32 %v1893, %v1932
    %v1945 = vadd.f32 %v1898, %v1933
    %v1946 = vadd.f32 %v1903, %v1934
    %v1947 = vadd.f32 %v1908, %v1935
    %v1948 = vadd.f32 %v1913, %v1936
    %v1949 = vadd.f32 %v1918, %v1937
    %v1950 = vld [vmem:[%s18 + $0x1] sm:$0x1]
    %v1951 = vlaneseq
    %v1952 = vshrl.u32 %v1951, 7
    %v1953 = vsub.s32 0, %v1952
    %v1954 = vrot.slane %v1950, %v1953
    %v1955 = vmul.f32 %v1478, %v1954
    %v1956 = vmul.f32 %v1482, %v1954
    %v1957 = vmul.f32 %v1486, %v1954
    %v1958 = vmul.f32 %v1490, %v1954
    %v1959 = vmul.f32 %v1494, %v1954
    %v1960 = vmul.f32 %v1498, %v1954
    %v1961 = vmul.f32 %v1502, %v1954
    %v1962 = vmul.f32 %v1506, %v1954
    %v1963 = vmul.f32 %v1510, %v1954
    %v1964 = vmul.f32 %v1514, %v1954
    %v1965 = vmul.f32 %v1518, %v1954
    %v1966 = vmul.f32 %v1522, %v1954
    %v1967 = vadd.f32 %v1938, %v1955
    %v1968 = vadd.f32 %v1939, %v1956
    %v1969 = vadd.f32 %v1940, %v1957
    %v1970 = vadd.f32 %v1941, %v1958
    %v1971 = vadd.f32 %v1942, %v1959
    %v1972 = vadd.f32 %v1943, %v1960
    %v1973 = vadd.f32 %v1944, %v1961
    %v1974 = vadd.f32 %v1945, %v1962
    %v1975 = vadd.f32 %v1946, %v1963
    %v1976 = vadd.f32 %v1947, %v1964
    %v1977 = vadd.f32 %v1948, %v1965
    %v1978 = vadd.f32 %v1949, %v1966
    %vm1979 = vcmask 474112
    %1980 = vst.msk [vmem:[#allocation8] sm:$0xff] %vm1979, %v1967
    %1981 = vst.msk [vmem:[#allocation8 + $0x8] sm:$0xff] %vm1979, %v1968
    %vm1982 = vcmask 15360
    %1983 = vst.msk [vmem:[%s21] sm:$0xff] %vm1982, %v1374
    %1984 = vst.msk [vmem:[%s21 + $0x8] sm:$0xff] %vm1982, %v1375
    %s1985 = scalar_lea.vmem [#allocation8], 16
    %1986 = vst.msk [vmem:[%s1985] sm:$0xff] %vm1979, %v1969
    %1987 = vst.msk [vmem:[%s1985 + $0x8] sm:$0xff] %vm1979, %v1970
    %s1988 = scalar_lea.vmem %s21, 16
    %1989 = vst.msk [vmem:[%s1988] sm:$0xff] %vm1982, %v1376
    %1990 = vst.msk [vmem:[%s1988 + $0x8] sm:$0xff] %vm1982, %v1377
    %s1991 = scalar_lea.vmem [#allocation8], 32
    %1992 = vst.msk [vmem:[%s1991] sm:$0xff] %vm1979, %v1971
    %1993 = vst.msk [vmem:[%s1991 + $0x8] sm:$0xff] %vm1979, %v1972
    %s1994 = scalar_lea.vmem %s21, 32
    %1995 = vst.msk [vmem:[%s1994] sm:$0xff] %vm1982, %v1378
    %1996 = vst.msk [vmem:[%s1994 + $0x8] sm:$0xff] %vm1982, %v1379
    %s1997 = scalar_lea.vmem [#allocation8], 48
    %1998 = vst.msk [vmem:[%s1997] sm:$0xff] %vm1979, %v1973
    %1999 = vst.msk [vmem:[%s1997 + $0x8] sm:$0xff] %vm1979, %v1974
    %s2000 = scalar_lea.vmem %s21, 48
    %2001 = vst.msk [vmem:[%s2000] sm:$0xff] %vm1982, %v1380
    %2002 = vst.msk [vmem:[%s2000 + $0x8] sm:$0xff] %vm1982, %v1381
    %s2003 = scalar_lea.vmem [#allocation8], 64
    %2004 = vst.msk [vmem:[%s2003] sm:$0xff] %vm1979, %v1975
    %2005 = vst.msk [vmem:[%s2003 + $0x8] sm:$0xff] %vm1979, %v1976
    %s2006 = scalar_lea.vmem %s21, 64
    %2007 = vst.msk [vmem:[%s2006] sm:$0xff] %vm1982, %v1382
    %2008 = vst.msk [vmem:[%s2006 + $0x8] sm:$0xff] %vm1982, %v1383
    %s2009 = scalar_lea.vmem [#allocation8], 80
    %2010 = vst.msk [vmem:[%s2009] sm:$0xff] %vm1979, %v1977
    %2011 = vst.msk [vmem:[%s2009 + $0x8] sm:$0xff] %vm1979, %v1978
    %s2012 = scalar_lea.vmem %s21, 80
    %2013 = vst.msk [vmem:[%s2012] sm:$0xff] %vm1982, %v1384
    %2014 = vst.msk [vmem:[%s2012 + $0x8] sm:$0xff] %vm1982, %v1385
    // Predicated region
    $region94: #{tpu_custom_call.1} parent=1 // pred_check
      _
    $region95: #{tpu_custom_call.1} parent=1 // pred_check_branch
      %2016 = sbr.rel (0) target = $region97
    $region96: #{tpu_custom_call.1} parent=1 // pred_region
      %s2018 = ssub.s32 1536, 1536
      %2019 = vsyncadd [#allocation4], %s2018
      %s2020 = sshll.u32 [#allocation8], 4
      %s2021 = int_to_ptr.vmem [resolvable:$true] %s2020
      %2026 = dma.vmem_to_hbm [thread:$0]  %s2021, 1536, %s20, [#allocation4], 128, 128, 8
    $region97: #{tpu_custom_call.1} parent=1 // pred_fallthru
      _
    // Predicated region
    $region98: #{tpu_custom_call.1} parent=1 // pred_check
      _
    $region99: #{tpu_custom_call.1} parent=1 // pred_check_branch
      %2028 = sbr.rel (0) target = $region101
    $region100: #{tpu_custom_call.1} parent=1 // pred_region
      _
    $region101: #{tpu_custom_call.1} parent=1 // pred_fallthru
      _
    // Predicated region
    $region102: #{tpu_custom_call.1} parent=1 // pred_check
      _
    $region103: #{tpu_custom_call.1} parent=1 // pred_check_branch
      %2030 = sbr.rel (0) target = $region105
    $region104: #{tpu_custom_call.1} parent=1 // pred_region
      %2031 = dma.done [#allocation4], 1536
    $region105: #{tpu_custom_call.1} parent=1 // pred_fallthru
      _
    // Predicated region
    $region106: #{tpu_custom_call.1} parent=1 // pred_check
      _
    $region107: #{tpu_custom_call.1} parent=1 // pred_check_branch
      %2033 = sbr.rel (0) target = $region109
    $region108: #{tpu_custom_call.1} parent=1 // pred_region
      _
    $region109: #{tpu_custom_call.1} parent=1 // pred_fallthru
      _
    %2034 = vsyncpa [#allocation3], 1
    %2035 = vsyncpa [#allocation6], 1
    %2036 = vsyncpa [#allocation4], 1

</llo_original>
